<compile_context>
chip_gen: v6e
topology: v6e:2x2x1
jax: 0.10.0
libtpu: 0.0.40
codegen_flags: <defaults>
</compile_context>

<pallas_src>
import math
from functools import partial

import jax
import jax.numpy as jnp
import numpy as np
from jax import lax
from jax.experimental import pallas as pl
from jax.experimental.pallas import tpu as pltpu


def _self_attention_kernel(x_ref, bias_ref,
                           wq_ref, bq_ref, wkv_ref, bkv_ref, wo_ref, bo_ref,
                           o_ref,
                           xn_s, qt_s, acc_s,
                           *, n_heads, key_block, matmul_dtype, approx_recip):
    kt = pl.program_id(1)
    n_kt = pl.num_programs(1)

    x = x_ref[0]                      # (S, D) f32, resident across the key axis
    S, D = x.shape
    dk = D // n_heads

    def mm(a, b, dims=((1,), (0,))):
        # 2-D MXU matmul with f32 accumulation; operands already in matmul_dtype.
        return lax.dot_general(a, b, dimension_numbers=(dims, ((), ())),
                               preferred_element_type=jnp.float32)

    # ---- once per batch row (first key slab): LayerNorm, Q^T proj, zero acc ----
    @pl.when(kt == 0)
    def _init():
        mu = jnp.mean(x, axis=-1, keepdims=True)
        var = jnp.mean((x - mu) ** 2, axis=-1, keepdims=True)
        xn = (x - mu) * lax.rsqrt(var + 1e-5)                 # f32 layernorm
        xn_m = xn.astype(matmul_dtype)
        xn_s[...] = xn_m
        # 1/sqrt(d_k) already folded into wq/bq by the wrapper.
        q = mm(xn_m, wq_ref[...]) + bq_ref[...]               # (S, D) f32
        qt_s[...] = q.T.astype(matmul_dtype)                  # (D, S), one transpose/batch
        acc_s[...] = jnp.zeros_like(acc_s)

    # ---- this key slab: fused K/V projection for rows [kt*TK, kt*TK + TK) ----
    k0 = pl.multiple_of(kt * key_block, key_block)
    xn_kv = xn_s[pl.ds(k0, key_block), :]                     # (TK, D)
    kv = mm(xn_kv, wkv_ref[...]) + bkv_ref[...]               # (TK, 2D) f32
    kv_m = kv.astype(matmul_dtype)                            # single hoisted cast

    qt = qt_s[...]                                            # (D, S), loaded once
    bias = jnp.broadcast_to(bias_ref[0], (key_block, S))      # additive mask bias, hoisted

    head_outs = []
    for h in range(n_heads):                                  # static unroll over heads
        lo = h * dk
        k_h = kv_m[:, lo:lo + dk]                             # (TK, dk)
        v_h = kv_m[:, D + lo:D + lo + dk]                     # (TK, dk)
        qt_h = qt[lo:lo + dk, :]                              # (dk, S), pre-scaled

        # scores_t[k, q] = K_h[k] . Q_h[q]  (+ per-query additive mask bias)
        scores_t = mm(k_h, qt_h) + bias                       # (TK, S) f32

        # masked softmax over the *query* axis (dim=-2 of (q,k) == lanes here)
        mx = jnp.max(scores_t, axis=-1, keepdims=True)        # (TK, 1)
        e = jnp.exp(scores_t - mx)                            # (TK, S)
        denom = jnp.sum(e, axis=-1, keepdims=True)            # (TK, 1)
        probs_t = e * pl.reciprocal(denom, approx=approx_recip)

        # head_out[q, d] = sum_k probs_t[k, q] * V_h[k, d]
        head_outs.append(mm(probs_t.astype(matmul_dtype), v_h, ((0,), (0,))))

    # Single lane-dense accumulator update per slab (no per-head column RMW).
    acc_s[...] = acc_s[...] + jnp.concatenate(head_outs, axis=-1)

    # ---- last key slab: output projection + residual, write the block ----
    @pl.when(kt == n_kt - 1)
    def _finalize():
        out = mm(acc_s[...].astype(matmul_dtype), wo_ref[...]) + bo_ref[...] + x
        o_ref[0] = out.astype(o_ref.dtype)


def self_attention_pallas(x, mask, params, n_heads, *,
                          key_block=None,
                          matmul_dtype=jnp.float32,   # jnp.bfloat16 on v6e/v7x
                          approx_recip=True):         # EUP vrcp; set False for exact
    """x: (B, S, D) f32, mask: (B, S) of 0/1.  Returns (B, S, D) f32."""
    B, S, D = x.shape
    assert D % n_heads == 0
    dk = D // n_heads

    if key_block is None:
        # v5e/v6e (128 MiB VMEM) tolerate 256-512; keep 256 as a v7x-safe default.
        key_block = min(S, 256)
    assert S % key_block == 0, "seq_len must be divisible by key_block"
    assert key_block == S or key_block % 8 == 0, "key_block must be sublane-aligned"
    n_kt = S // key_block

    wq, bq, wk, bk, wv, bv, wo, bo = params
    # Fold the 1/sqrt(d_k) attention scale into the Q projection (free).
    inv_sqrt_dk = jnp.float32(1.0 / math.sqrt(dk))
    wq_s = (wq * inv_sqrt_dk).astype(matmul_dtype)
    bq_s = (bq * inv_sqrt_dk).astype(jnp.float32)
    # Fused K||V projection weight (fills the MXU N dim; one matmul per slab).
    wkv = jnp.concatenate([wk, wv], axis=1).astype(matmul_dtype)      # (D, 2D)
    bkv = jnp.concatenate([bk, bv], axis=1).astype(jnp.float32)       # (1, 2D)
    wo_m = wo.astype(matmul_dtype)
    bo_f = bo.astype(jnp.float32)

    # Additive per-query mask bias, lane-dense: (B, 1, S).
    # mask==1 -> +0 ; mask==0 -> -1e30 (f32 rounding makes score-1e30 == -1e30).
    mask_bias = ((mask.astype(jnp.float32) - 1.0) * jnp.float32(1e30)).reshape(B, 1, S)

    kernel = partial(_self_attention_kernel, n_heads=n_heads,
                     key_block=key_block, matmul_dtype=matmul_dtype,
                     approx_recip=approx_recip)

    const = lambda shape: pl.BlockSpec(shape, lambda b, kt: (0, 0))

    # ---- generation-aware VMEM budget (leave headroom below physical) ----
    f32b = 4
    mdb = jnp.dtype(matmul_dtype).itemsize
    est = (2 * S * D * f32b * 2            # x / out blocks, double-buffered
           + S * f32b * 2                  # mask bias
           + 4 * D * D * mdb * 2           # Wq + Wkv + Wout, double-buffered
           + 4 * D * f32b * 2              # biases
           + 2 * S * D * mdb               # xn / Q^T scratch
           + S * D * f32b                  # accumulator scratch
           + 2 * key_block * D * (f32b + mdb)   # fused K/V slab (+cast copy)
           + 4 * key_block * S * f32b      # scores / exp / probs / bias temporaries
           + 3 * S * D * f32b)             # concat + epilogue temporaries
    try:
        vmem_cap = getattr(pltpu.get_tpu_info(), "vmem_capacity_bytes", 64 * 2**20)
    except Exception:                       # conservative fallback (v7x per-TC)
        vmem_cap = 64 * 2**20
    ceiling = max(int(vmem_cap) - 16 * 2**20, 32 * 2**20)
    vmem_limit = int(min(max(2 * est, 16 * 2**20), ceiling))

    return pl.pallas_call(
        kernel,
        out_shape=jax.ShapeDtypeStruct((B, S, D), x.dtype),
        grid_spec=pltpu.PrefetchScalarGridSpec(
            num_scalar_prefetch=0,
            grid=(B, n_kt),                # key-slab axis last (reduction)
            in_specs=[
                pl.BlockSpec((1, S, D), lambda b, kt: (b, 0, 0)),   # x
                pl.BlockSpec((1, 1, S), lambda b, kt: (b, 0, 0)),   # mask bias
                const((D, D)), const((1, D)),                       # Wq, bq (pre-scaled)
                const((D, 2 * D)), const((1, 2 * D)),               # Wk||Wv, bk||bv
                const((D, D)), const((1, D)),                       # Wout, bout
            ],
            out_specs=pl.BlockSpec((1, S, D), lambda b, kt: (b, 0, 0)),
            scratch_shapes=[
                pltpu.VMEM((S, D), matmul_dtype),   # x_norm
                pltpu.VMEM((D, S), matmul_dtype),   # Q^T (all heads, pre-scaled)
                pltpu.VMEM((S, D), jnp.float32),    # head-output accumulator
            ],
        ),
        compiler_params=pltpu.CompilerParams(
            dimension_semantics=("parallel", "arbitrary"),
            vmem_limit_bytes=vmem_limit),
    )(x, mask_bias, wq_s, bq_s, wkv, bkv, wo_m, bo_f)


def self_attention_ref(x, mask, params, n_heads):
    """Pure-JAX reference mirroring the PyTorch forward exactly."""
    B, S, D = x.shape
    dk = D // n_heads
    wq, bq, wk, bk, wv, bv, wo, bo = params
    m = mask.astype(jnp.float32)[:, :, None]              # (B, S, 1)

    mu = jnp.mean(x, axis=-1, keepdims=True)
    var = jnp.mean((x - mu) ** 2, axis=-1, keepdims=True)
    xn = (x - mu) / jnp.sqrt(var + 1e-5)

    heads = []
    for i in range(n_heads):
        sl = slice(i * dk, (i + 1) * dk)
        Q = xn @ wq[:, sl] + bq[0, sl]
        K = xn @ wk[:, sl] + bk[0, sl]
        V = xn @ wv[:, sl] + bv[0, sl]
        tmp = jnp.einsum('bqd,bkd->bqk', Q, K) / math.sqrt(dk)
        mask2d = jnp.broadcast_to(m, (B, S, S))
        logits = mask2d * tmp + (1.0 - mask2d) * (-1e30)
        probs = jax.nn.softmax(logits, axis=-2)            # softmax over queries
        heads.append(jnp.einsum('bqk,bkd->bqd', probs, V))
    hc = jnp.stack(heads, axis=2).reshape(B, S, D)
    return hc @ wo + bo[0] + x


if __name__ == "__main__":
    B, S, D, H = 2, 16, 32, 4          # small shapes; grid = (2 batch, 2 key slabs)
    key = jax.random.PRNGKey(0)
    ks = jax.random.split(key, 10)

    x = jax.random.normal(ks[0], (B, S, D), dtype=jnp.float32)
    # deterministic 0/1 mask; guarantee at least one valid query per row
    mask = (jax.random.uniform(ks[1], (B, S)) > 0.3).astype(jnp.float32)
    mask = mask.at[:, 0].set(1.0)

    scale = 1.0 / math.sqrt(D)
    params = (
        jax.random.normal(ks[2], (D, D), jnp.float32) * scale,   # Wq (stacked heads)
        jax.random.normal(ks[3], (1, D), jnp.float32) * 0.01,    # bq
        jax.random.normal(ks[4], (D, D), jnp.float32) * scale,   # Wk
        jax.random.normal(ks[5], (1, D), jnp.float32) * 0.01,    # bk
        jax.random.normal(ks[6], (D, D), jnp.float32) * scale,   # Wv
        jax.random.normal(ks[7], (1, D), jnp.float32) * 0.01,    # bv
        jax.random.normal(ks[8], (D, D), jnp.float32) * scale,   # Wout
        jax.random.normal(ks[9], (1, D), jnp.float32) * 0.01,    # bout
    )

    ref = self_attention_ref(x, mask, params, H)

    # Exact-reciprocal path: tight tolerance against the reference.
    out_exact = self_attention_pallas(x, mask, params, H, key_block=8,
                                      approx_recip=False)
    out_exact = jax.block_until_ready(out_exact)
    np.testing.assert_allclose(np.asarray(out_exact), np.asarray(ref),
                               rtol=2e-4, atol=2e-4)

    # Default production path (EUP approx reciprocal): looser tolerance.
    out = self_attention_pallas(x, mask, params, H, key_block=8)
    out = jax.block_until_ready(out)
    np.testing.assert_allclose(np.asarray(out), np.asarray(ref),
                               rtol=2e-2, atol=2e-2)

    print("KERNEL_OK")
</pallas_src>

<mosaic_0001>
module attributes {stable_mosaic.version = 11 : i64} {
  func.func @_self_attention_kernel(%arg0: i32, %arg1: i32, %arg2: memref<1x16x32xf32, #tpu.memory_space<vmem>>, %arg3: memref<1x1x16xf32, #tpu.memory_space<vmem>>, %arg4: memref<32x32xf32, #tpu.memory_space<vmem>>, %arg5: memref<1x32xf32, #tpu.memory_space<vmem>>, %arg6: memref<32x64xf32, #tpu.memory_space<vmem>>, %arg7: memref<1x64xf32, #tpu.memory_space<vmem>>, %arg8: memref<32x32xf32, #tpu.memory_space<vmem>>, %arg9: memref<1x32xf32, #tpu.memory_space<vmem>>, %arg10: memref<1x16x32xf32, #tpu.memory_space<vmem>>, %arg11: memref<16x32xf32, #tpu.memory_space<vmem>>, %arg12: memref<32x16xf32, #tpu.memory_space<vmem>>, %arg13: memref<16x32xf32, #tpu.memory_space<vmem>>) attributes {dimension_semantics = [#tpu.dimension_semantics<parallel>, #tpu.dimension_semantics<arbitrary>], iteration_bounds = array<i64: 2, 2>, scalar_prefetch = 0 : i64, scratch_operands = 3 : i64, tpu.core_type = #tpu.core_type<tc>, window_params = [{transform_indices = @transform_0, window_bounds = array<i64: 1, 16, 32>}, {transform_indices = @transform_1, window_bounds = array<i64: 1, 1, 16>}, {pipeline_mode = #tpu.pipeline_mode<synchronous>, transform_indices = @transform_2, window_bounds = array<i64: 32, 32>}, {pipeline_mode = #tpu.pipeline_mode<synchronous>, transform_indices = @transform_3, window_bounds = array<i64: 1, 32>}, {pipeline_mode = #tpu.pipeline_mode<synchronous>, transform_indices = @transform_4, window_bounds = array<i64: 32, 64>}, {pipeline_mode = #tpu.pipeline_mode<synchronous>, transform_indices = @transform_5, window_bounds = array<i64: 1, 64>}, {pipeline_mode = #tpu.pipeline_mode<synchronous>, transform_indices = @transform_6, window_bounds = array<i64: 32, 32>}, {pipeline_mode = #tpu.pipeline_mode<synchronous>, transform_indices = @transform_7, window_bounds = array<i64: 1, 32>}, {transform_indices = @transform_8, window_bounds = array<i64: 1, 16, 32>}]} {
    %c0 = arith.constant 0 : index
    %c0_0 = arith.constant 0 : index
    %c0_1 = arith.constant 0 : index
    %0 = vector.load %arg2[%c0, %c0_0, %c0_1] : memref<1x16x32xf32, #tpu.memory_space<vmem>>, vector<1x16x32xf32>
    %1 = vector.shape_cast %0 : vector<1x16x32xf32> to vector<16x32xf32>
    %c0_i32 = arith.constant 0 : i32
    %2 = arith.cmpi eq, %arg1, %c0_i32 : i32
    %3 = arith.extui %2 : i1 to i32
    %c0_i32_2 = arith.constant 0 : i32
    %4 = arith.cmpi ne, %3, %c0_i32_2 : i32
    scf.if %4 {
      %cst_34 = arith.constant dense<0.000000e+00> : vector<16xf32>
      %90 = vector.multi_reduction <add>, %1, %cst_34 [1] : vector<16x32xf32> to vector<16xf32>
      %91 = vector.shape_cast %90 : vector<16xf32> to vector<16x1xf32>
      %cst_35 = arith.constant 3.200000e+01 : f32
      %92 = vector.broadcast %cst_35 : f32 to vector<16x1xf32>
      %93 = arith.divf %91, %92 : vector<16x1xf32>
      %94 = vector.broadcast %93 : vector<16x1xf32> to vector<16x32xf32>
      %95 = arith.subf %1, %94 : vector<16x32xf32>
      %96 = arith.mulf %95, %95 : vector<16x32xf32>
      %cst_36 = arith.constant dense<0.000000e+00> : vector<16xf32>
      %97 = vector.multi_reduction <add>, %96, %cst_36 [1] : vector<16x32xf32> to vector<16xf32>
      %98 = vector.shape_cast %97 : vector<16xf32> to vector<16x1xf32>
      %cst_37 = arith.constant 3.200000e+01 : f32
      %99 = vector.broadcast %cst_37 : f32 to vector<16x1xf32>
      %100 = arith.divf %98, %99 : vector<16x1xf32>
      %101 = vector.broadcast %93 : vector<16x1xf32> to vector<16x32xf32>
      %102 = arith.subf %1, %101 : vector<16x32xf32>
      %cst_38 = arith.constant 9.99999974E-6 : f32
      %103 = vector.broadcast %cst_38 : f32 to vector<16x1xf32>
      %104 = arith.addf %100, %103 : vector<16x1xf32>
      %105 = math.rsqrt %104 : vector<16x1xf32>
      %106 = vector.broadcast %105 : vector<16x1xf32> to vector<16x32xf32>
      %107 = arith.mulf %102, %106 : vector<16x32xf32>
      %c0_39 = arith.constant 0 : index
      %c0_40 = arith.constant 0 : index
      %108 = vector.load %arg11[%c0_39, %c0_40] : memref<16x32xf32, #tpu.memory_space<vmem>>, vector<16x32xf32>
      tpu.vector_store %arg11[%c0_39, %c0_40], %107 {strides = array<i32>} : memref<16x32xf32, #tpu.memory_space<vmem>>, vector<16x32xf32>,
      %c0_41 = arith.constant 0 : index
      %c0_42 = arith.constant 0 : index
      %109 = vector.load %arg4[%c0_41, %c0_42] : memref<32x32xf32, #tpu.memory_space<vmem>>, vector<32x32xf32>
      %cst_43 = arith.constant dense<0.000000e+00> : vector<16x32xf32>
      %110 = tpu.matmul %107, %109, %cst_43 {dimension_numbers = #tpu.dot_dimension_numbers<[1], [0], [0], [1], [0, 0, 1, 1], [], []>} : vector<16x32xf32>, vector<32x32xf32>, vector<16x32xf32> -> vector<16x32xf32>
      %c0_44 = arith.constant 0 : index
      %c0_45 = arith.constant 0 : index
      %111 = vector.load %arg5[%c0_44, %c0_45] : memref<1x32xf32, #tpu.memory_space<vmem>>, vector<1x32xf32>
      %112 = vector.broadcast %111 : vector<1x32xf32> to vector<16x32xf32>
      %113 = arith.addf %110, %112 : vector<16x32xf32>
      %114 = tpu.transpose %113, [1, 0] : vector<16x32xf32> -> vector<32x16xf32>
      %c0_46 = arith.constant 0 : index
      %c0_47 = arith.constant 0 : index
      %115 = vector.load %arg12[%c0_46, %c0_47] : memref<32x16xf32, #tpu.memory_space<vmem>>, vector<32x16xf32>
      tpu.vector_store %arg12[%c0_46, %c0_47], %114 {strides = array<i32>} : memref<32x16xf32, #tpu.memory_space<vmem>>, vector<32x16xf32>,
      %cst_48 = arith.constant 0.000000e+00 : f32
      %116 = vector.broadcast %cst_48 : f32 to vector<16x32xf32>
      %c0_49 = arith.constant 0 : index
      %c0_50 = arith.constant 0 : index
      %117 = vector.load %arg13[%c0_49, %c0_50] : memref<16x32xf32, #tpu.memory_space<vmem>>, vector<16x32xf32>
      tpu.vector_store %arg13[%c0_49, %c0_50], %116 {strides = array<i32>} : memref<16x32xf32, #tpu.memory_space<vmem>>, vector<16x32xf32>,
    } else {
    }
    %c8_i32 = arith.constant 8 : i32
    %5 = arith.muli %arg1, %c8_i32 : i32
    %6 = tpu.assume_multiple %5, 8 : i32
    %7 = arith.index_cast %6 : i32 to index
    %c0_3 = arith.constant 0 : index
    %8 = vector.load %arg11[%7, %c0_3] : memref<16x32xf32, #tpu.memory_space<vmem>>, vector<8x32xf32>
    %c0_4 = arith.constant 0 : index
    %c0_5 = arith.constant 0 : index
    %9 = vector.load %arg6[%c0_4, %c0_5] : memref<32x64xf32, #tpu.memory_space<vmem>>, vector<32x64xf32>
    %cst = arith.constant dense<0.000000e+00> : vector<8x64xf32>
    %10 = tpu.matmul %8, %9, %cst {dimension_numbers = #tpu.dot_dimension_numbers<[1], [0], [0], [1], [0, 0, 1, 1], [], []>} : vector<8x32xf32>, vector<32x64xf32>, vector<8x64xf32> -> vector<8x64xf32>
    %c0_6 = arith.constant 0 : index
    %c0_7 = arith.constant 0 : index
    %11 = vector.load %arg7[%c0_6, %c0_7] : memref<1x64xf32, #tpu.memory_space<vmem>>, vector<1x64xf32>
    %12 = vector.broadcast %11 : vector<1x64xf32> to vector<8x64xf32>
    %13 = arith.addf %10, %12 : vector<8x64xf32>
    %c0_8 = arith.constant 0 : index
    %c0_9 = arith.constant 0 : index
    %14 = vector.load %arg12[%c0_8, %c0_9] : memref<32x16xf32, #tpu.memory_space<vmem>>, vector<32x16xf32>
    %c0_10 = arith.constant 0 : index
    %c0_11 = arith.constant 0 : index
    %c0_12 = arith.constant 0 : index
    %15 = vector.load %arg3[%c0_10, %c0_11, %c0_12] : memref<1x1x16xf32, #tpu.memory_space<vmem>>, vector<1x1x16xf32>
    %16 = vector.shape_cast %15 : vector<1x1x16xf32> to vector<1x16xf32>
    %17 = vector.shape_cast %16 : vector<1x16xf32> to vector<1x16xf32>
    %18 = vector.broadcast %17 : vector<1x16xf32> to vector<8x16xf32>
    %19 = vector.extract_strided_slice %13 {offsets = [0, 0], sizes = [8, 8], strides = [1, 1]} : vector<8x64xf32> to vector<8x8xf32>
    %20 = vector.extract_strided_slice %13 {offsets = [0, 32], sizes = [8, 8], strides = [1, 1]} : vector<8x64xf32> to vector<8x8xf32>
    %21 = vector.extract_strided_slice %14 {offsets = [0, 0], sizes = [8, 16], strides = [1, 1]} : vector<32x16xf32> to vector<8x16xf32>
    %cst_13 = arith.constant dense<0.000000e+00> : vector<8x16xf32>
    %22 = tpu.matmul %19, %21, %cst_13 {dimension_numbers = #tpu.dot_dimension_numbers<[1], [0], [0], [1], [0, 0, 1, 1], [], []>} : vector<8x8xf32>, vector<8x16xf32>, vector<8x16xf32> -> vector<8x16xf32>
    %23 = arith.addf %22, %18 : vector<8x16xf32>
    %cst_14 = arith.constant dense<0xFF800000> : vector<8xf32>
    %24 = vector.multi_reduction <maximumf>, %23, %cst_14 [1] : vector<8x16xf32> to vector<8xf32>
    %25 = vector.shape_cast %24 : vector<8xf32> to vector<8x1xf32>
    %26 = vector.broadcast %25 : vector<8x1xf32> to vector<8x16xf32>
    %27 = arith.subf %23, %26 : vector<8x16xf32>
    %28 = math.exp %27 : vector<8x16xf32>
    %cst_15 = arith.constant dense<0.000000e+00> : vector<8xf32>
    %29 = vector.multi_reduction <add>, %28, %cst_15 [1] : vector<8x16xf32> to vector<8xf32>
    %30 = vector.shape_cast %29 : vector<8xf32> to vector<8x1xf32>
    %31 = tpu.reciprocal %30 : vector<8x1xf32> -> vector<8x1xf32>
    %32 = vector.broadcast %31 : vector<8x1xf32> to vector<8x16xf32>
    %33 = arith.mulf %28, %32 : vector<8x16xf32>
    %cst_16 = arith.constant dense<0.000000e+00> : vector<16x8xf32>
    %34 = tpu.matmul %33, %20, %cst_16 {dimension_numbers = #tpu.dot_dimension_numbers<[0], [0], [1], [1], [0, 1, 1, 1], [], []>} : vector<8x16xf32>, vector<8x8xf32>, vector<16x8xf32> -> vector<16x8xf32>
    %35 = vector.extract_strided_slice %13 {offsets = [0, 8], sizes = [8, 8], strides = [1, 1]} : vector<8x64xf32> to vector<8x8xf32>
    %36 = vector.extract_strided_slice %13 {offsets = [0, 40], sizes = [8, 8], strides = [1, 1]} : vector<8x64xf32> to vector<8x8xf32>
    %37 = vector.extract_strided_slice %14 {offsets = [8, 0], sizes = [8, 16], strides = [1, 1]} : vector<32x16xf32> to vector<8x16xf32>
    %cst_17 = arith.constant dense<0.000000e+00> : vector<8x16xf32>
    %38 = tpu.matmul %35, %37, %cst_17 {dimension_numbers = #tpu.dot_dimension_numbers<[1], [0], [0], [1], [0, 0, 1, 1], [], []>} : vector<8x8xf32>, vector<8x16xf32>, vector<8x16xf32> -> vector<8x16xf32>
    %39 = arith.addf %38, %18 : vector<8x16xf32>
    %cst_18 = arith.constant dense<0xFF800000> : vector<8xf32>
    %40 = vector.multi_reduction <maximumf>, %39, %cst_18 [1] : vector<8x16xf32> to vector<8xf32>
    %41 = vector.shape_cast %40 : vector<8xf32> to vector<8x1xf32>
    %42 = vector.broadcast %41 : vector<8x1xf32> to vector<8x16xf32>
    %43 = arith.subf %39, %42 : vector<8x16xf32>
    %44 = math.exp %43 : vector<8x16xf32>
    %cst_19 = arith.constant dense<0.000000e+00> : vector<8xf32>
    %45 = vector.multi_reduction <add>, %44, %cst_19 [1] : vector<8x16xf32> to vector<8xf32>
    %46 = vector.shape_cast %45 : vector<8xf32> to vector<8x1xf32>
    %47 = tpu.reciprocal %46 : vector<8x1xf32> -> vector<8x1xf32>
    %48 = vector.broadcast %47 : vector<8x1xf32> to vector<8x16xf32>
    %49 = arith.mulf %44, %48 : vector<8x16xf32>
    %cst_20 = arith.constant dense<0.000000e+00> : vector<16x8xf32>
    %50 = tpu.matmul %49, %36, %cst_20 {dimension_numbers = #tpu.dot_dimension_numbers<[0], [0], [1], [1], [0, 1, 1, 1], [], []>} : vector<8x16xf32>, vector<8x8xf32>, vector<16x8xf32> -> vector<16x8xf32>
    %51 = vector.extract_strided_slice %13 {offsets = [0, 16], sizes = [8, 8], strides = [1, 1]} : vector<8x64xf32> to vector<8x8xf32>
    %52 = vector.extract_strided_slice %13 {offsets = [0, 48], sizes = [8, 8], strides = [1, 1]} : vector<8x64xf32> to vector<8x8xf32>
    %53 = vector.extract_strided_slice %14 {offsets = [16, 0], sizes = [8, 16], strides = [1, 1]} : vector<32x16xf32> to vector<8x16xf32>
    %cst_21 = arith.constant dense<0.000000e+00> : vector<8x16xf32>
    %54 = tpu.matmul %51, %53, %cst_21 {dimension_numbers = #tpu.dot_dimension_numbers<[1], [0], [0], [1], [0, 0, 1, 1], [], []>} : vector<8x8xf32>, vector<8x16xf32>, vector<8x16xf32> -> vector<8x16xf32>
    %55 = arith.addf %54, %18 : vector<8x16xf32>
    %cst_22 = arith.constant dense<0xFF800000> : vector<8xf32>
    %56 = vector.multi_reduction <maximumf>, %55, %cst_22 [1] : vector<8x16xf32> to vector<8xf32>
    %57 = vector.shape_cast %56 : vector<8xf32> to vector<8x1xf32>
    %58 = vector.broadcast %57 : vector<8x1xf32> to vector<8x16xf32>
    %59 = arith.subf %55, %58 : vector<8x16xf32>
    %60 = math.exp %59 : vector<8x16xf32>
    %cst_23 = arith.constant dense<0.000000e+00> : vector<8xf32>
    %61 = vector.multi_reduction <add>, %60, %cst_23 [1] : vector<8x16xf32> to vector<8xf32>
    %62 = vector.shape_cast %61 : vector<8xf32> to vector<8x1xf32>
    %63 = tpu.reciprocal %62 : vector<8x1xf32> -> vector<8x1xf32>
    %64 = vector.broadcast %63 : vector<8x1xf32> to vector<8x16xf32>
    %65 = arith.mulf %60, %64 : vector<8x16xf32>
    %cst_24 = arith.constant dense<0.000000e+00> : vector<16x8xf32>
    %66 = tpu.matmul %65, %52, %cst_24 {dimension_numbers = #tpu.dot_dimension_numbers<[0], [0], [1], [1], [0, 1, 1, 1], [], []>} : vector<8x16xf32>, vector<8x8xf32>, vector<16x8xf32> -> vector<16x8xf32>
    %67 = vector.extract_strided_slice %13 {offsets = [0, 24], sizes = [8, 8], strides = [1, 1]} : vector<8x64xf32> to vector<8x8xf32>
    %68 = vector.extract_strided_slice %13 {offsets = [0, 56], sizes = [8, 8], strides = [1, 1]} : vector<8x64xf32> to vector<8x8xf32>
    %69 = vector.extract_strided_slice %14 {offsets = [24, 0], sizes = [8, 16], strides = [1, 1]} : vector<32x16xf32> to vector<8x16xf32>
    %cst_25 = arith.constant dense<0.000000e+00> : vector<8x16xf32>
    %70 = tpu.matmul %67, %69, %cst_25 {dimension_numbers = #tpu.dot_dimension_numbers<[1], [0], [0], [1], [0, 0, 1, 1], [], []>} : vector<8x8xf32>, vector<8x16xf32>, vector<8x16xf32> -> vector<8x16xf32>
    %71 = arith.addf %70, %18 : vector<8x16xf32>
    %cst_26 = arith.constant dense<0xFF800000> : vector<8xf32>
    %72 = vector.multi_reduction <maximumf>, %71, %cst_26 [1] : vector<8x16xf32> to vector<8xf32>
    %73 = vector.shape_cast %72 : vector<8xf32> to vector<8x1xf32>
    %74 = vector.broadcast %73 : vector<8x1xf32> to vector<8x16xf32>
    %75 = arith.subf %71, %74 : vector<8x16xf32>
    %76 = math.exp %75 : vector<8x16xf32>
    %cst_27 = arith.constant dense<0.000000e+00> : vector<8xf32>
    %77 = vector.multi_reduction <add>, %76, %cst_27 [1] : vector<8x16xf32> to vector<8xf32>
    %78 = vector.shape_cast %77 : vector<8xf32> to vector<8x1xf32>
    %79 = tpu.reciprocal %78 : vector<8x1xf32> -> vector<8x1xf32>
    %80 = vector.broadcast %79 : vector<8x1xf32> to vector<8x16xf32>
    %81 = arith.mulf %76, %80 : vector<8x16xf32>
    %cst_28 = arith.constant dense<0.000000e+00> : vector<16x8xf32>
    %82 = tpu.matmul %81, %68, %cst_28 {dimension_numbers = #tpu.dot_dimension_numbers<[0], [0], [1], [1], [0, 1, 1, 1], [], []>} : vector<8x16xf32>, vector<8x8xf32>, vector<16x8xf32> -> vector<16x8xf32>
    %c0_29 = arith.constant 0 : index
    %c0_30 = arith.constant 0 : index
    %83 = vector.load %arg13[%c0_29, %c0_30] : memref<16x32xf32, #tpu.memory_space<vmem>>, vector<16x32xf32>
    %84 = tpu.concatenate %34, %50, %66, %82 in 1 : vector<16x8xf32>, vector<16x8xf32>, vector<16x8xf32>, vector<16x8xf32> -> vector<16x32xf32>
    %85 = arith.addf %83, %84 : vector<16x32xf32>
    %c0_31 = arith.constant 0 : index
    %c0_32 = arith.constant 0 : index
    %86 = vector.load %arg13[%c0_31, %c0_32] : memref<16x32xf32, #tpu.memory_space<vmem>>, vector<16x32xf32>
    tpu.vector_store %arg13[%c0_31, %c0_32], %85 {strides = array<i32>} : memref<16x32xf32, #tpu.memory_space<vmem>>, vector<16x32xf32>,
    %c1_i32 = arith.constant 1 : i32
    %87 = arith.cmpi eq, %arg1, %c1_i32 : i32
    %88 = arith.extui %87 : i1 to i32
    %c0_i32_33 = arith.constant 0 : i32
    %89 = arith.cmpi ne, %88, %c0_i32_33 : i32
    scf.if %89 {
      %c0_34 = arith.constant 0 : index
      %c0_35 = arith.constant 0 : index
      %90 = vector.load %arg13[%c0_34, %c0_35] : memref<16x32xf32, #tpu.memory_space<vmem>>, vector<16x32xf32>
      %c0_36 = arith.constant 0 : index
      %c0_37 = arith.constant 0 : index
      %91 = vector.load %arg8[%c0_36, %c0_37] : memref<32x32xf32, #tpu.memory_space<vmem>>, vector<32x32xf32>
      %cst_38 = arith.constant dense<0.000000e+00> : vector<16x32xf32>
      %92 = tpu.matmul %90, %91, %cst_38 {dimension_numbers = #tpu.dot_dimension_numbers<[1], [0], [0], [1], [0, 0, 1, 1], [], []>} : vector<16x32xf32>, vector<32x32xf32>, vector<16x32xf32> -> vector<16x32xf32>
      %c0_39 = arith.constant 0 : index
      %c0_40 = arith.constant 0 : index
      %93 = vector.load %arg9[%c0_39, %c0_40] : memref<1x32xf32, #tpu.memory_space<vmem>>, vector<1x32xf32>
      %94 = vector.broadcast %93 : vector<1x32xf32> to vector<16x32xf32>
      %95 = arith.addf %92, %94 : vector<16x32xf32>
      %96 = arith.addf %95, %1 : vector<16x32xf32>
      %c0_41 = arith.constant 0 : index
      %c0_42 = arith.constant 0 : index
      %c0_43 = arith.constant 0 : index
      %97 = vector.load %arg10[%c0_41, %c0_42, %c0_43] : memref<1x16x32xf32, #tpu.memory_space<vmem>>, vector<1x16x32xf32>
      %98 = vector.shape_cast %97 : vector<1x16x32xf32> to vector<16x32xf32>
      %99 = vector.shape_cast %96 : vector<16x32xf32> to vector<1x16x32xf32>
      tpu.vector_store %arg10[%c0_41, %c0_42, %c0_43], %99 {strides = array<i32>} : memref<1x16x32xf32, #tpu.memory_space<vmem>>, vector<1x16x32xf32>,
    } else {
    }
    return
  }
  func.func @transform_0(%arg0: i32, %arg1: i32) -> (i32, i32, i32) {
    %c0_i32 = arith.constant 0 : i32
    %c0_i32_0 = arith.constant 0 : i32
    %c0_i32_1 = arith.constant 0 : i32
    return %arg0, %c0_i32, %c0_i32_0 : i32, i32, i32
  }
  func.func @transform_1(%arg0: i32, %arg1: i32) -> (i32, i32, i32) {
    %c0_i32 = arith.constant 0 : i32
    %c0_i32_0 = arith.constant 0 : i32
    %c0_i32_1 = arith.constant 0 : i32
    return %arg0, %c0_i32, %c0_i32_0 : i32, i32, i32
  }
  func.func @transform_2(%arg0: i32, %arg1: i32) -> (i32, i32) {
    %c0_i32 = arith.constant 0 : i32
    %c0_i32_0 = arith.constant 0 : i32
    %c0_i32_1 = arith.constant 0 : i32
    return %c0_i32, %c0_i32_0 : i32, i32
  }
  func.func @transform_3(%arg0: i32, %arg1: i32) -> (i32, i32) {
    %c0_i32 = arith.constant 0 : i32
    %c0_i32_0 = arith.constant 0 : i32
    %c0_i32_1 = arith.constant 0 : i32
    return %c0_i32, %c0_i32_0 : i32, i32
  }
  func.func @transform_4(%arg0: i32, %arg1: i32) -> (i32, i32) {
    %c0_i32 = arith.constant 0 : i32
    %c0_i32_0 = arith.constant 0 : i32
    %c0_i32_1 = arith.constant 0 : i32
    return %c0_i32, %c0_i32_0 : i32, i32
  }
  func.func @transform_5(%arg0: i32, %arg1: i32) -> (i32, i32) {
    %c0_i32 = arith.constant 0 : i32
    %c0_i32_0 = arith.constant 0 : i32
    %c0_i32_1 = arith.constant 0 : i32
    return %c0_i32, %c0_i32_0 : i32, i32
  }
  func.func @transform_6(%arg0: i32, %arg1: i32) -> (i32, i32) {
    %c0_i32 = arith.constant 0 : i32
    %c0_i32_0 = arith.constant 0 : i32
    %c0_i32_1 = arith.constant 0 : i32
    return %c0_i32, %c0_i32_0 : i32, i32
  }
  func.func @transform_7(%arg0: i32, %arg1: i32) -> (i32, i32) {
    %c0_i32 = arith.constant 0 : i32
    %c0_i32_0 = arith.constant 0 : i32
    %c0_i32_1 = arith.constant 0 : i32
    return %c0_i32, %c0_i32_0 : i32, i32
  }
  func.func @transform_8(%arg0: i32, %arg1: i32) -> (i32, i32, i32) {
    %c0_i32 = arith.constant 0 : i32
    %c0_i32_0 = arith.constant 0 : i32
    %c0_i32_1 = arith.constant 0 : i32
    return %arg0, %c0_i32, %c0_i32_0 : i32, i32, i32
  }
}

</mosaic_0001>

<llo_original>
// kernel: tpu_custom_call.1
$region0: #{tpu_custom_call.1}
  #allocation0 [shape = 'u32[]', space=smem, size = 0x4, offset = 0x4, fixed_abs, tag = 'smem constant byte address 0x4 - core index']
  #allocation1 [shape = 'u32[144,128]{1,0:T(1,128)}', space=vmem, size = 0x12000, scoped, tag = 'internal scratch']
  #allocation2 [shape = 'f32[16,32]{1,0:T(8,128)}', space=vmem, size = 0x2000, scoped, tag = 'scratch operand']
  #allocation3 [shape = 'f32[32,16]{1,0:T(8,128)}', space=vmem, size = 0x4000, scoped, tag = 'scratch operand']
  #allocation4 [shape = 'f32[16,32]{1,0:T(8,128)}', space=vmem, size = 0x2000, scoped, tag = 'scratch operand']
  %s0 = inlined_call_operand.hbm [shape: f32[2,16,32], index: 0, kind: input, shape index: {}]
  %s1 = inlined_call_operand.hbm [shape: f32[2,1,16], index: 1, kind: input, shape index: {}]
  %s2 = inlined_call_operand.hbm [shape: f32[32,32], index: 2, kind: input, shape index: {}]
  %s3 = inlined_call_operand.vmem [shape: f32[1,32], index: 3, kind: input, shape index: {}]
  %s4 = inlined_call_operand.hbm [shape: f32[32,64], index: 4, kind: input, shape index: {}]
  %s5 = inlined_call_operand.vmem [shape: f32[1,64], index: 5, kind: input, shape index: {}]
  %s6 = inlined_call_operand.hbm [shape: f32[32,32], index: 6, kind: input, shape index: {}]
  %s7 = inlined_call_operand.vmem [shape: f32[1,32], index: 7, kind: input, shape index: {}]
  %s8 = inlined_call_operand.hbm [shape: f32[2,16,32], index: 8, kind: output, shape index: {}]
  %s9 = sld [smem:[#allocation0]]
  $region93: #{tpu_custom_call.1} parent=0
    _
  %s11 = ssub.s32 1, %s9
  %s12 = scalar_select 0, %s11, %s9
  $region1: #{tpu_custom_call.1} parent=0
    #allocation5 [shape = 'u8[16384]{0}', space=vmem, size = 0x4000, scoped, tag = 'input window, operand 0']
    #allocation6 [shape = 's32[2]{0}', space=sflag, size = 0x8, scoped, tag = 'scoped memory for tpu_custom_call.1']
    #allocation7 [shape = 's32[2]{0}', space=sflag, size = 0x8, scoped, tag = 'scoped memory for tpu_custom_call.1']
    #allocation8 [shape = 'u8[1024]{0}', space=vmem, size = 0x400, scoped, tag = 'input window, operand 1']
    #allocation9 [shape = 's32[2]{0}', space=sflag, size = 0x8, scoped, tag = 'scoped memory for tpu_custom_call.1']
    #allocation10 [shape = 'u8[16384]{0}', space=vmem, size = 0x4000, scoped, tag = 'input window, operand 2, single buffered']
    #allocation11 [shape = 'u8[16384]{0}', space=vmem, size = 0x4000, scoped, tag = 'input window, operand 4, single buffered']
    #allocation12 [shape = 's32[1]{0}', space=sflag, size = 0x4, scoped, tag = 'scoped memory for tpu_custom_call.1']
    #allocation13 [shape = 'u8[16384]{0}', space=vmem, size = 0x4000, scoped, tag = 'input window, operand 6, single buffered']
    #allocation14 [shape = 'u8[16384]{0}', space=vmem, size = 0x4000, scoped, tag = 'output window, operand 0']
    %13 = vsyncpa [#allocation6], 0
    %s14 = scalar_lea.sflag [#allocation6], 1
    %15 = vsyncpa %s14, 0
    %16 = vsyncpa [#allocation9], 0
    %s17 = scalar_lea.sflag [#allocation9], 1
    %18 = vsyncpa %s17, 0
    %19 = vsyncpa [#allocation12], 0
    %20 = vsyncpa [#allocation7], 0
    %s21 = scalar_lea.sflag [#allocation7], 1
    %22 = vsyncpa %s21, 0
    loop: start=0, step=1, limit=6
    $region2: #{tpu_custom_call.1} parent=1 // loop_pre_header
      _
    $region3: #{tpu_custom_call.1} parent=1 // loop_header
      %s24 = sphi 0, %s28
      %p25 = scmp.ge.s32.totalorder %s24, 6
      %s31 = sphi 0, %s43
      %s32 = sphi 0, %s39
      %s33 = sphi 0, %s31
      %s34 = sphi 0, %s32
      %s35 = sphi 0, %s33
      %s36 = sphi 0, %s34
      %s46 = sphi 0, %s48
      %s49 = sphi 0, %s46
      %s50 = sphi 0, %s49
      %s66 = sphi 0, %s50
      %s72 = sphi 0, %s74
      %s75 = sphi 0, %s72
      %s76 = sphi 0, %s75
      %s92 = sphi 0, %s76
      %s96 = sphi 0, %s96
      %s98 = sphi 0, %s96
      %s99 = sphi 0, %s98
      %s113 = sphi 0, %s99
      %s117 = sphi 0, %s117
      %s119 = sphi 0, %s117
      %s120 = sphi 0, %s119
      %s134 = sphi 0, %s120
      %s138 = sphi 0, %s138
      %s140 = sphi 0, %s138
      %s141 = sphi 0, %s140
      %s155 = sphi 0, %s141
      %s159 = sphi 0, %s159
      %s161 = sphi 0, %s159
      %s162 = sphi 0, %s161
      %s176 = sphi 0, %s162
      %s180 = sphi 0, %s180
      %s182 = sphi 0, %s180
      %s183 = sphi 0, %s182
      %s197 = sphi 0, %s183
      %s201 = sphi 0, %s201
      %s203 = sphi 0, %s201
      %s204 = sphi 0, %s203
      %s218 = sphi 0, %s204
      %s224 = sphi 0, %s226
      %s227 = sphi 0, %s224
      %s228 = sphi 0, %s227
      %s244 = sphi 0, %s228
    $region4: #{tpu_custom_call.1} parent=1 // loop_header_branch
      %27 = sbr.rel (%p25) target = $region8
    $region5: #{tpu_custom_call.1} parent=1 // loop_body
      %s29 = ssub.s32 %s24, 1
      %s30 = ssub.s32 %s24, 2
      %s37 = sadd.s32 1, %s32
      %p38 = scmp.ge.s32.totalorder %s37, 2
      %s39 = scalar_select %p38, 0, %s37
      %s40 = sadd.s32 1, %s31
      %s41 = scalar_select %p38, %s40, %s31
      %p42 = scmp.ge.s32.totalorder %s41, 2
      %s43 = scalar_select %p42, 0, %s41
      %s44 = ssub.s32 %s31, %s43
      %p45 = scmp.eq.s32.totalorder %s44, 0
      %s47 = sadd.s32 %s46, 1
      %s48 = scalar_select %p45, %s46, %s47
      %p51 = pneg %p45
      %p52 = scmp.eq.s32.totalorder %s24, 3
      %p53 = por %p51, %p52
      %p54 = scmp.ne.s32.totalorder %s46, %s49
      %p55 = scmp.eq.s32.totalorder %s24, 0
      %p56 = por %p54, %p55
      %p57 = scmp.ne.s32.totalorder %s46, %s49
      %p58 = scmp.eq.s32.totalorder %s29, 3
      %p59 = por %p57, %p58
      %p60 = scmp.ne.s32.totalorder %s49, %s50
      %p61 = scmp.eq.s32.totalorder %s29, 0
      %p62 = por %p60, %p61
      %p63 = scmp.ne.s32.totalorder %s49, %s50
      %p64 = scmp.eq.s32.totalorder %s30, 3
      %p65 = por %p63, %p64
      %p67 = scmp.ne.s32.totalorder %s50, %s66
      %p68 = scmp.eq.s32.totalorder %s30, 0
      %p69 = por %p67, %p68
      %s70 = ssub.s32 %s31, %s43
      %p71 = scmp.eq.s32.totalorder %s70, 0
      %s73 = sadd.s32 %s72, 1
      %s74 = scalar_select %p71, %s72, %s73
      %p77 = pneg %p71
      %p78 = scmp.eq.s32.totalorder %s24, 3
      %p79 = por %p77, %p78
      %p80 = scmp.ne.s32.totalorder %s72, %s75
      %p81 = scmp.eq.s32.totalorder %s24, 0
      %p82 = por %p80, %p81
      %p83 = scmp.ne.s32.totalorder %s72, %s75
      %p84 = scmp.eq.s32.totalorder %s29, 3
      %p85 = por %p83, %p84
      %p86 = scmp.ne.s32.totalorder %s75, %s76
      %p87 = scmp.eq.s32.totalorder %s29, 0
      %p88 = por %p86, %p87
      %p89 = scmp.ne.s32.totalorder %s75, %s76
      %p90 = scmp.eq.s32.totalorder %s30, 3
      %p91 = por %p89, %p90
      %p93 = scmp.ne.s32.totalorder %s76, %s92
      %p94 = scmp.eq.s32.totalorder %s30, 0
      %p95 = por %p93, %p94
      %s97 = sadd.s32 %s96, 1
      %p100 = scmp.eq.s32.totalorder %s24, 3
      %p101 = scmp.ne.s32.totalorder %s96, %s98
      %p102 = scmp.eq.s32.totalorder %s24, 0
      %p103 = por %p101, %p102
      %p104 = scmp.ne.s32.totalorder %s96, %s98
      %p105 = scmp.eq.s32.totalorder %s29, 3
      %p106 = por %p104, %p105
      %p107 = scmp.ne.s32.totalorder %s98, %s99
      %p108 = scmp.eq.s32.totalorder %s29, 0
      %p109 = por %p107, %p108
      %p110 = scmp.ne.s32.totalorder %s98, %s99
      %p111 = scmp.eq.s32.totalorder %s30, 3
      %p112 = por %p110, %p111
      %p114 = scmp.ne.s32.totalorder %s99, %s113
      %p115 = scmp.eq.s32.totalorder %s30, 0
      %p116 = por %p114, %p115
      %s118 = sadd.s32 %s117, 1
      %p121 = scmp.eq.s32.totalorder %s24, 3
      %p122 = scmp.ne.s32.totalorder %s117, %s119
      %p123 = scmp.eq.s32.totalorder %s24, 0
      %p124 = por %p122, %p123
      %p125 = scmp.ne.s32.totalorder %s117, %s119
      %p126 = scmp.eq.s32.totalorder %s29, 3
      %p127 = por %p125, %p126
      %p128 = scmp.ne.s32.totalorder %s119, %s120
      %p129 = scmp.eq.s32.totalorder %s29, 0
      %p130 = por %p128, %p129
      %p131 = scmp.ne.s32.totalorder %s119, %s120
      %p132 = scmp.eq.s32.totalorder %s30, 3
      %p133 = por %p131, %p132
      %p135 = scmp.ne.s32.totalorder %s120, %s134
      %p136 = scmp.eq.s32.totalorder %s30, 0
      %p137 = por %p135, %p136
      %s139 = sadd.s32 %s138, 1
      %p142 = scmp.eq.s32.totalorder %s24, 3
      %p143 = scmp.ne.s32.totalorder %s138, %s140
      %p144 = scmp.eq.s32.totalorder %s24, 0
      %p145 = por %p143, %p144
      %p146 = scmp.ne.s32.totalorder %s138, %s140
      %p147 = scmp.eq.s32.totalorder %s29, 3
      %p148 = por %p146, %p147
      %p149 = scmp.ne.s32.totalorder %s140, %s141
      %p150 = scmp.eq.s32.totalorder %s29, 0
      %p151 = por %p149, %p150
      %p152 = scmp.ne.s32.totalorder %s140, %s141
      %p153 = scmp.eq.s32.totalorder %s30, 3
      %p154 = por %p152, %p153
      %p156 = scmp.ne.s32.totalorder %s141, %s155
      %p157 = scmp.eq.s32.totalorder %s30, 0
      %p158 = por %p156, %p157
      %s160 = sadd.s32 %s159, 1
      %p163 = scmp.eq.s32.totalorder %s24, 3
      %p164 = scmp.ne.s32.totalorder %s159, %s161
      %p165 = scmp.eq.s32.totalorder %s24, 0
      %p166 = por %p164, %p165
      %p167 = scmp.ne.s32.totalorder %s159, %s161
      %p168 = scmp.eq.s32.totalorder %s29, 3
      %p169 = por %p167, %p168
      %p170 = scmp.ne.s32.totalorder %s161, %s162
      %p171 = scmp.eq.s32.totalorder %s29, 0
      %p172 = por %p170, %p171
      %p173 = scmp.ne.s32.totalorder %s161, %s162
      %p174 = scmp.eq.s32.totalorder %s30, 3
      %p175 = por %p173, %p174
      %p177 = scmp.ne.s32.totalorder %s162, %s176
      %p178 = scmp.eq.s32.totalorder %s30, 0
      %p179 = por %p177, %p178
      %s181 = sadd.s32 %s180, 1
      %p184 = scmp.eq.s32.totalorder %s24, 3
      %p185 = scmp.ne.s32.totalorder %s180, %s182
      %p186 = scmp.eq.s32.totalorder %s24, 0
      %p187 = por %p185, %p186
      %p188 = scmp.ne.s32.totalorder %s180, %s182
      %p189 = scmp.eq.s32.totalorder %s29, 3
      %p190 = por %p188, %p189
      %p191 = scmp.ne.s32.totalorder %s182, %s183
      %p192 = scmp.eq.s32.totalorder %s29, 0
      %p193 = por %p191, %p192
      %p194 = scmp.ne.s32.totalorder %s182, %s183
      %p195 = scmp.eq.s32.totalorder %s30, 3
      %p196 = por %p194, %p195
      %p198 = scmp.ne.s32.totalorder %s183, %s197
      %p199 = scmp.eq.s32.totalorder %s30, 0
      %p200 = por %p198, %p199
      %s202 = sadd.s32 %s201, 1
      %p205 = scmp.eq.s32.totalorder %s24, 3
      %p206 = scmp.ne.s32.totalorder %s201, %s203
      %p207 = scmp.eq.s32.totalorder %s24, 0
      %p208 = por %p206, %p207
      %p209 = scmp.ne.s32.totalorder %s201, %s203
      %p210 = scmp.eq.s32.totalorder %s29, 3
      %p211 = por %p209, %p210
      %p212 = scmp.ne.s32.totalorder %s203, %s204
      %p213 = scmp.eq.s32.totalorder %s29, 0
      %p214 = por %p212, %p213
      %p215 = scmp.ne.s32.totalorder %s203, %s204
      %p216 = scmp.eq.s32.totalorder %s30, 3
      %p217 = por %p215, %p216
      %p219 = scmp.ne.s32.totalorder %s204, %s218
      %p220 = scmp.eq.s32.totalorder %s30, 0
      %p221 = por %p219, %p220
      %s222 = ssub.s32 %s31, %s43
      %p223 = scmp.eq.s32.totalorder %s222, 0
      %s225 = sadd.s32 %s224, 1
      %s226 = scalar_select %p223, %s224, %s225
      %p229 = pneg %p223
      %p230 = scmp.eq.s32.totalorder %s24, 3
      %p231 = por %p229, %p230
      %p232 = scmp.ne.s32.totalorder %s224, %s227
      %p233 = scmp.eq.s32.totalorder %s24, 0
      %p234 = por %p232, %p233
      %p235 = scmp.ne.s32.totalorder %s224, %s227
      %p236 = scmp.eq.s32.totalorder %s29, 3
      %p237 = por %p235, %p236
      %p238 = scmp.ne.s32.totalorder %s227, %s228
      %p239 = scmp.eq.s32.totalorder %s29, 0
      %p240 = por %p238, %p239
      %p241 = scmp.ne.s32.totalorder %s227, %s228
      %p242 = scmp.eq.s32.totalorder %s30, 3
      %p243 = por %p241, %p242
      %p245 = scmp.ne.s32.totalorder %s228, %s244
      %p246 = scmp.eq.s32.totalorder %s30, 0
      %p247 = por %p245, %p246
      %p248 = scmp.le.s32.totalorder 1, %s24
      %p249 = scmp.lt.s32.totalorder %s24, 5
      %p250 = pnand %p248, %p249
      %p251 = pneg %p250
      // Predicated region
      $region9: #{tpu_custom_call.1} parent=5 // pred_check
        _
      $region10: #{tpu_custom_call.1} parent=5 // pred_check_branch
        %253 = sbr.rel (%p250) target = $region12
      $region11: #{tpu_custom_call.1} parent=5 // pred_region
        %s254 = ssub.s32 %s24, 1
        // Predicated region
        $region13: #{tpu_custom_call.1} parent=11 // pred_check
          %p255 = pneg %p109
        $region14: #{tpu_custom_call.1} parent=11 // pred_check_branch
          %257 = sbr.rel (%p255) target = $region16
        $region15: #{tpu_custom_call.1} parent=11 // pred_region
          %s259 = ssub.s32 512, 512
          %260 = vsyncadd [#allocation9], %s259
          %s261 = sshll.u32 [#allocation10], 4
          %s262 = int_to_ptr.vmem [resolvable:$true] %s261
          %267 = dma.hbm_to_vmem [thread:$0]  %s2, 512, %s262, [#allocation9], 128, 128, 8
        $region16: #{tpu_custom_call.1} parent=11 // pred_fallthru
          _
        // Predicated region
        $region17: #{tpu_custom_call.1} parent=11 // pred_check
          %p268 = pneg %p130
        $region18: #{tpu_custom_call.1} parent=11 // pred_check_branch
          %270 = sbr.rel (%p268) target = $region20
        $region19: #{tpu_custom_call.1} parent=11 // pred_region
          _
        $region20: #{tpu_custom_call.1} parent=11 // pred_fallthru
          _
        // Predicated region
        $region21: #{tpu_custom_call.1} parent=11 // pred_check
          %p271 = pneg %p151
        $region22: #{tpu_custom_call.1} parent=11 // pred_check_branch
          %273 = sbr.rel (%p271) target = $region24
        $region23: #{tpu_custom_call.1} parent=11 // pred_region
          %s275 = ssub.s32 512, 512
          %276 = vsyncadd [#allocation12], %s275
          %s277 = sshll.u32 [#allocation11], 4
          %s278 = int_to_ptr.vmem [resolvable:$true] %s277
          %283 = dma.hbm_to_vmem [thread:$0]  %s4, 512, %s278, [#allocation12], 128, 128, 8
        $region24: #{tpu_custom_call.1} parent=11 // pred_fallthru
          _
        // Predicated region
        $region25: #{tpu_custom_call.1} parent=11 // pred_check
          %p284 = pneg %p172
        $region26: #{tpu_custom_call.1} parent=11 // pred_check_branch
          %286 = sbr.rel (%p284) target = $region28
        $region27: #{tpu_custom_call.1} parent=11 // pred_region
          _
        $region28: #{tpu_custom_call.1} parent=11 // pred_fallthru
          _
        // Predicated region
        $region29: #{tpu_custom_call.1} parent=11 // pred_check
          %p287 = pneg %p193
        $region30: #{tpu_custom_call.1} parent=11 // pred_check_branch
          %289 = sbr.rel (%p287) target = $region32
        $region31: #{tpu_custom_call.1} parent=11 // pred_region
          %s291 = ssub.s32 512, 512
          %292 = vsyncadd [#allocation12], %s291
          %s293 = sshll.u32 [#allocation13], 4
          %s294 = int_to_ptr.vmem [resolvable:$true] %s293
          %299 = dma.hbm_to_vmem [thread:$0]  %s6, 512, %s294, [#allocation12], 128, 128, 8
        $region32: #{tpu_custom_call.1} parent=11 // pred_fallthru
          _
        // Predicated region
        $region33: #{tpu_custom_call.1} parent=11 // pred_check
          %p300 = pneg %p214
        $region34: #{tpu_custom_call.1} parent=11 // pred_check_branch
          %302 = sbr.rel (%p300) target = $region36
        $region35: #{tpu_custom_call.1} parent=11 // pred_region
          _
        $region36: #{tpu_custom_call.1} parent=11 // pred_fallthru
          _
      $region12: #{tpu_custom_call.1} parent=5 // pred_fallthru
        _
      %p303 = scmp.lt.s32.totalorder %s24, 4
      // Predicated region
      $region37: #{tpu_custom_call.1} parent=5 // pred_check
        %p304 = pneg %p303
      $region38: #{tpu_custom_call.1} parent=5 // pred_check_branch
        %306 = sbr.rel (%p304) target = $region40
      $region39: #{tpu_custom_call.1} parent=5 // pred_region
        // Predicated region
        $region41: #{tpu_custom_call.1} parent=39 // pred_check
          %p307 = pneg %p56
        $region42: #{tpu_custom_call.1} parent=39 // pred_check_branch
          %309 = sbr.rel (%p307) target = $region44
        $region43: #{tpu_custom_call.1} parent=39 // pred_region
          %s310 = sand.u32 %s46, 1
          %s311 = scalar_lea.sflag [#allocation6], %s310
          %s312 = sand.u32 %s46, 1
          %s313 = smul.addr %s312, 16
          %s314 = scalar_lea.vmem [#allocation5], %s313
          %s316 = ssub.s32 256, 256
          %317 = vsyncadd %s311, %s316
          %s318 = smul.addr %s31, 2
          %s319 = smul.addr %s318, 128
          %s320 = scalar_lea.hbm %s0, %s319
          %s321 = sshll.u32 %s314, 4
          %s322 = int_to_ptr.vmem [resolvable:$true] %s321
          %327 = dma.hbm_to_vmem [thread:$0]  %s320, 256, %s322, %s311, 128, 128, 8
        $region44: #{tpu_custom_call.1} parent=39 // pred_fallthru
          _
        // Predicated region
        $region45: #{tpu_custom_call.1} parent=39 // pred_check
          %p328 = pneg %p82
        $region46: #{tpu_custom_call.1} parent=39 // pred_check_branch
          %330 = sbr.rel (%p328) target = $region48
        $region47: #{tpu_custom_call.1} parent=39 // pred_region
          %s331 = sand.u32 %s24, 1
          %s332 = scalar_lea.sflag [#allocation9], %s331
          %s333 = sand.u32 %s72, 1
          %s334 = scalar_lea.vmem [#allocation8], %s333
          %s336 = ssub.s32 16, 16
          %337 = vsyncadd %s332, %s336
          %s338 = smul.addr %s31, 16
          %s339 = scalar_lea.hbm %s1, %s338
          %s341 = sshll.u32 %s334, 4
          %s342 = int_to_ptr.vmem [resolvable:$true] %s341
          %344 = dma.hbm_to_vmem [thread:$0]  %s339, 16, %s342, %s332
        $region48: #{tpu_custom_call.1} parent=39 // pred_fallthru
          _
      $region40: #{tpu_custom_call.1} parent=5 // pred_fallthru
        _
      %p345 = scmp.le.s32.totalorder 1, %s24
      %p346 = scmp.lt.s32.totalorder %s24, 5
      %p347 = pnand %p345, %p346
      %p348 = pneg %p347
      // Predicated region
      $region49: #{tpu_custom_call.1} parent=5 // pred_check
        _
      $region50: #{tpu_custom_call.1} parent=5 // pred_check_branch
        %350 = sbr.rel (%p347) target = $region52
      $region51: #{tpu_custom_call.1} parent=5 // pred_region
        %s351 = ssub.s32 %s24, 1
        %s352 = sand.u32 %s49, 1
        %s353 = scalar_lea.sflag [#allocation6], %s352
        %s354 = sand.u32 %s49, 1
        %s355 = smul.addr %s354, 16
        %s356 = scalar_lea.vmem [#allocation5], %s355
        // Predicated region
        $region53: #{tpu_custom_call.1} parent=51 // pred_check
          %p357 = pneg %p62
        $region54: #{tpu_custom_call.1} parent=51 // pred_check_branch
          %359 = sbr.rel (%p357) target = $region56
        $region55: #{tpu_custom_call.1} parent=51 // pred_region
          %360 = dma.done %s353, 256
        $region56: #{tpu_custom_call.1} parent=51 // pred_fallthru
          _
        %s361 = sand.u32 %s29, 1
        %s362 = scalar_lea.sflag [#allocation9], %s361
        %s363 = sand.u32 %s75, 1
        %s364 = scalar_lea.vmem [#allocation8], %s363
        // Predicated region
        $region57: #{tpu_custom_call.1} parent=51 // pred_check
          %p365 = pneg %p88
        $region58: #{tpu_custom_call.1} parent=51 // pred_check_branch
          %367 = sbr.rel (%p365) target = $region60
        $region59: #{tpu_custom_call.1} parent=51 // pred_region
          %368 = dma.done %s362, 16
        $region60: #{tpu_custom_call.1} parent=51 // pred_fallthru
          _
        // Predicated region
        $region61: #{tpu_custom_call.1} parent=51 // pred_check
          %p369 = pneg %p109
        $region62: #{tpu_custom_call.1} parent=51 // pred_check_branch
          %371 = sbr.rel (%p369) target = $region64
        $region63: #{tpu_custom_call.1} parent=51 // pred_region
          %372 = dma.done [#allocation9], 512
        $region64: #{tpu_custom_call.1} parent=51 // pred_fallthru
          _
        // Predicated region
        $region65: #{tpu_custom_call.1} parent=51 // pred_check
          %p373 = pneg %p151
        $region66: #{tpu_custom_call.1} parent=51 // pred_check_branch
          %375 = sbr.rel (%p373) target = $region68
        $region67: #{tpu_custom_call.1} parent=51 // pred_region
          %376 = dma.done [#allocation12], 512
        $region68: #{tpu_custom_call.1} parent=51 // pred_fallthru
          _
        // Predicated region
        $region69: #{tpu_custom_call.1} parent=51 // pred_check
          %p377 = pneg %p193
        $region70: #{tpu_custom_call.1} parent=51 // pred_check_branch
          %379 = sbr.rel (%p377) target = $region72
        $region71: #{tpu_custom_call.1} parent=51 // pred_region
          %380 = dma.done [#allocation12], 512
        $region72: #{tpu_custom_call.1} parent=51 // pred_fallthru
          _
        %s381 = sand.u32 %s49, 1
        %s382 = scalar_lea.sflag [#allocation6], %s381
        %s383 = sand.u32 %s49, 1
        %s384 = smul.addr %s383, 16
        %s385 = scalar_lea.vmem [#allocation5], %s384
        %p386 = pneg %p62
        %p387 = pneg %p59
        %s388 = sand.u32 %s29, 1
        %s389 = scalar_lea.sflag [#allocation9], %s388
        %s390 = sand.u32 %s75, 1
        %s391 = scalar_lea.vmem [#allocation8], %s390
        %p392 = pneg %p88
        %p393 = pneg %p85
        %p394 = pneg %p109
        %p395 = pneg %p106
        %p396 = pneg %p130
        %p397 = pneg %p127
        %p398 = pneg %p151
        %p399 = pneg %p148
        %p400 = pneg %p172
        %p401 = pneg %p169
        %p402 = pneg %p193
        %p403 = pneg %p190
        %p404 = pneg %p214
        %p405 = pneg %p211
        %p406 = pneg %p240
        %p407 = pneg %p237
        %s408 = sand.u32 %s227, 1
        %s409 = scalar_lea.sflag [#allocation7], %s408
        %s410 = sand.u32 %s227, 1
        %s411 = smul.addr %s410, 16
        %s412 = scalar_lea.vmem [#allocation14], %s411
        %v413 = vld [vmem:[%s356] sm:$0xff]
        %v414 = vld [vmem:[%s356 + $0x8] sm:$0xff]
        %p415 = scmp.eq.s32.totalorder %s34, 0
        // Predicated region
        $region73: #{tpu_custom_call.1} parent=51 // pred_check
          %p416 = pneg %p415
        $region74: #{tpu_custom_call.1} parent=51 // pred_check_branch
          %418 = sbr.rel (%p416) target = $region76
        $region75: #{tpu_custom_call.1} parent=51 // pred_region
          %vm419 = vcmask 261120
          %v420 = vsel %vm419, %v413, 0.0
          %421 = vadd.xlane.f32.xlu0 %v420
          %v422 = vpop.xlane.xlu0 %421
          %v423 = vsel %vm419, %v414, 0.0
          %424 = vadd.xlane.f32.xlu0 %v423
          %v425 = vpop.xlane.xlu0 %424
          %v426 = vrcp.pop 32.0
          %v427 = vmul.f32 %v422, %v426
          %v428 = vmul.f32 %v425, %v426
          %v429 = vsub.f32 %v413, %v427
          %v430 = vsub.f32 %v414, %v428
          %v431 = vmul.f32 %v429, %v429
          %v432 = vmul.f32 %v430, %v430
          %v433 = vsel %vm419, %v431, 0.0
          %434 = vadd.xlane.f32.xlu0 %v433
          %v435 = vpop.xlane.xlu0 %434
          %v436 = vsel %vm419, %v432, 0.0
          %437 = vadd.xlane.f32.xlu0 %v436
          %v438 = vpop.xlane.xlu0 %437
          %v439 = vmul.f32 %v435, %v426
          %v440 = vmul.f32 %v438, %v426
          %v441 = vadd.f32 %v439, 1e-05
          %v442 = vadd.f32 %v440, 1e-05
          %v443 = vrsqrt.pop %v441
          %v444 = vrsqrt.pop %v442
          %v445 = vmul.f32 %v429, %v443
          %v446 = vmul.f32 %v430, %v444
          %447 = vst.msk [vmem:[#allocation2] sm:$0xff] %vm419, %v445
          %448 = vst.msk [vmem:[#allocation2 + $0x8] sm:$0xff] %vm419, %v446
          %v449 = vld [vmem:[#allocation10] sm:$0xff]
          %v450 = vld [vmem:[#allocation10 + $0x8] sm:$0xff]
          %v451 = vld [vmem:[#allocation10 + $0x10] sm:$0xff]
          %v452 = vld [vmem:[#allocation10 + $0x18] sm:$0xff]
          %v453 = vld [vmem:[%s3] sm:$0x1]
          %v455 = vlaneseq
          %v456 = vshrl.u32 %v455, 7
          %v457 = vsub.s32 0, %v456
          %v458 = vrot.slane %v453, %v457
          %v461 = vsel %vm419, %v445, 0
          %v464 = vsel %vm419, %v446, 0
          %466 = vmatprep.subr.mxu0 0.0
          %467 = vmatpush1.msra.mxu0 0.0
          %468 = vmatprep.subr.mxu0 0.0
          %469 = vmatpush1.msra.mxu0 0.0
          %470 = vmatprep.subr.mxu0 0.0
          %471 = vmatpush1.msra.mxu0 0.0
          %472 = vmatprep.subr.mxu0 0.0
          %473 = vmatpush1.msra.mxu0 0.0
          %474 = vmatprep.subr.mxu0 0.0
          %475 = vmatpush1.msra.mxu0 0.0
          %476 = vmatprep.subr.mxu0 0.0
          %477 = vmatpush1.msra.mxu0 0.0
          %478 = vmatprep.subr.mxu0 0.0
          %479 = vmatpush1.msra.mxu0 0.0
          %480 = vmatprep.subr.mxu0 0.0
          %481 = vmatpush1.msra.mxu0 0.0
          %482 = vmatprep.subr.mxu0 0.0
          %483 = vmatpush1.msra.mxu0 0.0
          %484 = vmatprep.subr.mxu0 0.0
          %485 = vmatpush1.msra.mxu0 0.0
          %486 = vmatprep.subr.mxu0 0.0
          %487 = vmatpush1.msra.mxu0 0.0
          %488 = vmatprep.subr.mxu0 0.0
          %489 = vmatpush1.msra.mxu0 0.0
          %490 = vmatprep.subr.mxu0 0.0
          %491 = vmatpush1.msra.mxu0 %v452
          %492 = vmatprep.subr.mxu0 0.0
          %493 = vmatpush1.msra.mxu0 %v451
          %494 = vmatprep.subr.mxu0 0.0
          %495 = vmatpush1.msra.mxu0 %v450
          %496 = vmatprep.subr.mxu0 0.0
          %497 = vmatpush1.msra.mxu0 %v449
          %498 = vmatprep.subr.mxu0 0.0
          %499 = vmatpush2.msra.mxu0 0.0
          %500 = vmatprep.subr.mxu0 0.0
          %501 = vmatpush2.msra.mxu0 0.0
          %502 = vmatprep.subr.mxu0 0.0
          %503 = vmatpush2.msra.mxu0 0.0
          %504 = vmatprep.subr.mxu0 0.0
          %505 = vmatpush2.msra.mxu0 0.0
          %506 = vmatprep.subr.mxu0 0.0
          %507 = vmatpush2.msra.mxu0 0.0
          %508 = vmatprep.subr.mxu0 0.0
          %509 = vmatpush2.msra.mxu0 0.0
          %510 = vmatprep.subr.mxu0 0.0
          %511 = vmatpush2.msra.mxu0 0.0
          %512 = vmatprep.subr.mxu0 0.0
          %513 = vmatpush2.msra.mxu0 0.0
          %514 = vmatprep.subr.mxu0 0.0
          %515 = vmatpush2.msra.mxu0 0.0
          %516 = vmatprep.subr.mxu0 0.0
          %517 = vmatpush2.msra.mxu0 0.0
          %518 = vmatprep.subr.mxu0 0.0
          %519 = vmatpush2.msra.mxu0 0.0
          %520 = vmatprep.subr.mxu0 0.0
          %521 = vmatpush2.msra.mxu0 0.0
          %522 = vmatprep.subr.mxu0 0.0
          %523 = vmatpush2.msra.mxu0 0.0
          %524 = vmatprep.subr.mxu0 0.0
          %525 = vmatpush2.msra.mxu0 0.0
          %526 = vmatprep.subr.mxu0 0.0
          %527 = vmatpush2.msra.mxu0 0.0
          %528 = vmatprep.subr.mxu0 0.0
          %529 = vmatpush2.msra.mxu0 0.0
          %530 = vmatprep.mubr.f32.mxu0 0.0
          %531 = vmatmul.mubr.f32.gmra.mxu0 %v461
          %v532 = vpop.f32.mrf.mxu0
          %v533 = vadd.f32 %v458, %v532
          %v534 = vpop.f32.mrf.mxu0
          %535 = vmatprep.mubr.f32.mxu0 0.0
          %536 = vmatmul.mubr.f32.gmra.mxu0 %v464
          %v537 = vpop.f32.mrf.mxu0
          %v538 = vadd.f32 %v458, %v537
          %v539 = vpop.f32.mrf.mxu0
          %540 = vdwg.mxu0
          %541 = vxpose.xlu0.b32.start [1/16] %v533, 128
          %542 = vxpose.xlu0.b32.cont [2/16] %v538, 128
          %543 = vxpose.xlu0.b32.cont [3/16] 0.0, 128
          %544 = vxpose.xlu0.b32.cont [4/16] 0.0, 128
          %545 = vxpose.xlu0.b32.cont [5/16] 0.0, 128
          %546 = vxpose.xlu0.b32.cont [6/16] 0.0, 128
          %547 = vxpose.xlu0.b32.cont [7/16] 0.0, 128
          %548 = vxpose.xlu0.b32.cont [8/16] 0.0, 128
          %549 = vxpose.xlu0.b32.cont [9/16] 0.0, 128
          %550 = vxpose.xlu0.b32.cont [10/16] 0.0, 128
          %551 = vxpose.xlu0.b32.cont [11/16] 0.0, 128
          %552 = vxpose.xlu0.b32.cont [12/16] 0.0, 128
          %553 = vxpose.xlu0.b32.cont [13/16] 0.0, 128
          %554 = vxpose.xlu0.b32.cont [14/16] 0.0, 128
          %555 = vxpose.xlu0.b32.cont [15/16] 0.0, 128
          %556 = vxpose.xlu0.b32.end [16/16] 0.0, 128
          %v557 = vpop.trf.xlu0
          %v558 = vpop.trf.xlu0
          %v559 = vpop.trf.xlu0
          %v560 = vpop.trf.xlu0
          %v561 = vpop.trf.xlu0
          %v562 = vpop.trf.xlu0
          %v563 = vpop.trf.xlu0
          %v564 = vpop.trf.xlu0
          %v565 = vpop.trf.xlu0
          %v566 = vpop.trf.xlu0
          %v567 = vpop.trf.xlu0
          %v568 = vpop.trf.xlu0
          %v569 = vpop.trf.xlu0
          %v570 = vpop.trf.xlu0
          %v571 = vpop.trf.xlu0
          %v572 = vpop.trf.xlu0
          %vm573 = vcmask 130048
          %574 = vst.msk [vmem:[#allocation3] sm:$0xff] %vm573, %v557
          %575 = vst.msk [vmem:[#allocation3 + $0x8] sm:$0xff] %vm573, %v558
          %576 = vst.msk [vmem:[#allocation3 + $0x10] sm:$0xff] %vm573, %v559
          %577 = vst.msk [vmem:[#allocation3 + $0x18] sm:$0xff] %vm573, %v560
          %578 = vst.msk [vmem:[#allocation4] sm:$0xff] %vm419, 0.0
          %579 = vst.msk [vmem:[#allocation4 + $0x8] sm:$0xff] %vm419, 0.0
        $region76: #{tpu_custom_call.1} parent=51 // pred_fallthru
          _
        %s580 = smul.u32 %s34, 8
        %s581 = scalar_lea.vmem [#allocation2], %s580
        %v582 = vld [vmem:[%s581] sm:$0xff]
        %v583 = vld [vmem:[#allocation11] sm:$0xff]
        %v584 = vld [vmem:[#allocation11 + $0x8] sm:$0xff]
        %v585 = vld [vmem:[#allocation11 + $0x10] sm:$0xff]
        %v586 = vld [vmem:[#allocation11 + $0x18] sm:$0xff]
        %v587 = vld [vmem:[%s5] sm:$0x1]
        %v589 = vlaneseq
        %v590 = vshrl.u32 %v589, 7
        %v591 = vsub.s32 0, %v590
        %v592 = vrot.slane %v587, %v591
        %vm594 = vcmask 261120
        %v596 = vsel %vm594, %v582, 0
        %598 = vmatprep.subr.mxu0 0.0
        %599 = vmatpush1.msra.mxu0 0.0
        %600 = vmatprep.subr.mxu0 0.0
        %601 = vmatpush1.msra.mxu0 0.0
        %602 = vmatprep.subr.mxu0 0.0
        %603 = vmatpush1.msra.mxu0 0.0
        %604 = vmatprep.subr.mxu0 0.0
        %605 = vmatpush1.msra.mxu0 0.0
        %606 = vmatprep.subr.mxu0 0.0
        %607 = vmatpush1.msra.mxu0 0.0
        %608 = vmatprep.subr.mxu0 0.0
        %609 = vmatpush1.msra.mxu0 0.0
        %610 = vmatprep.subr.mxu0 0.0
        %611 = vmatpush1.msra.mxu0 0.0
        %612 = vmatprep.subr.mxu0 0.0
        %613 = vmatpush1.msra.mxu0 0.0
        %614 = vmatprep.subr.mxu0 0.0
        %615 = vmatpush1.msra.mxu0 0.0
        %616 = vmatprep.subr.mxu0 0.0
        %617 = vmatpush1.msra.mxu0 0.0
        %618 = vmatprep.subr.mxu0 0.0
        %619 = vmatpush1.msra.mxu0 0.0
        %620 = vmatprep.subr.mxu0 0.0
        %621 = vmatpush1.msra.mxu0 0.0
        %622 = vmatprep.subr.mxu0 0.0
        %623 = vmatpush1.msra.mxu0 %v586
        %624 = vmatprep.subr.mxu0 0.0
        %625 = vmatpush1.msra.mxu0 %v585
        %626 = vmatprep.subr.mxu0 0.0
        %627 = vmatpush1.msra.mxu0 %v584
        %628 = vmatprep.subr.mxu0 0.0
        %629 = vmatpush1.msra.mxu0 %v583
        %630 = vmatprep.subr.mxu0 0.0
        %631 = vmatpush2.msra.mxu0 0.0
        %632 = vmatprep.subr.mxu0 0.0
        %633 = vmatpush2.msra.mxu0 0.0
        %634 = vmatprep.subr.mxu0 0.0
        %635 = vmatpush2.msra.mxu0 0.0
        %636 = vmatprep.subr.mxu0 0.0
        %637 = vmatpush2.msra.mxu0 0.0
        %638 = vmatprep.subr.mxu0 0.0
        %639 = vmatpush2.msra.mxu0 0.0
        %640 = vmatprep.subr.mxu0 0.0
        %641 = vmatpush2.msra.mxu0 0.0
        %642 = vmatprep.subr.mxu0 0.0
        %643 = vmatpush2.msra.mxu0 0.0
        %644 = vmatprep.subr.mxu0 0.0
        %645 = vmatpush2.msra.mxu0 0.0
        %646 = vmatprep.subr.mxu0 0.0
        %647 = vmatpush2.msra.mxu0 0.0
        %648 = vmatprep.subr.mxu0 0.0
        %649 = vmatpush2.msra.mxu0 0.0
        %650 = vmatprep.subr.mxu0 0.0
        %651 = vmatpush2.msra.mxu0 0.0
        %652 = vmatprep.subr.mxu0 0.0
        %653 = vmatpush2.msra.mxu0 0.0
        %654 = vmatprep.subr.mxu0 0.0
        %655 = vmatpush2.msra.mxu0 0.0
        %656 = vmatprep.subr.mxu0 0.0
        %657 = vmatpush2.msra.mxu0 0.0
        %658 = vmatprep.subr.mxu0 0.0
        %659 = vmatpush2.msra.mxu0 0.0
        %660 = vmatprep.subr.mxu0 0.0
        %661 = vmatpush2.msra.mxu0 0.0
        %662 = vmatprep.mubr.f32.mxu0 0.0
        %663 = vmatmul.mubr.f32.gmra.mxu0 %v596
        %v664 = vpop.f32.mrf.mxu0
        %v665 = vadd.f32 %v592, %v664
        %v666 = vpop.f32.mrf.mxu0
        %667 = vdwg.mxu0
        %v668 = vld [vmem:[#allocation3] sm:$0xff]
        %v669 = vld [vmem:[#allocation3 + $0x8] sm:$0xff]
        %v670 = vld [vmem:[#allocation3 + $0x10] sm:$0xff]
        %v671 = vld [vmem:[#allocation3 + $0x18] sm:$0xff]
        %v672 = vld [vmem:[%s364] sm:$0x1]
        %v674 = vlaneseq
        %v675 = vshrl.u32 %v674, 7
        %v676 = vsub.s32 0, %v675
        %v677 = vrot.slane %v672, %v676
        %vm679 = vcmask 64512
        %v681 = vsel %vm679, %v665, 0
        %683 = vmatprep.subr.mxu0 0.0
        %684 = vmatpush1.msra.mxu0 0.0
        %685 = vmatprep.subr.mxu0 0.0
        %686 = vmatpush1.msra.mxu0 0.0
        %687 = vmatprep.subr.mxu0 0.0
        %688 = vmatpush1.msra.mxu0 0.0
        %689 = vmatprep.subr.mxu0 0.0
        %690 = vmatpush1.msra.mxu0 0.0
        %691 = vmatprep.subr.mxu0 0.0
        %692 = vmatpush1.msra.mxu0 0.0
        %693 = vmatprep.subr.mxu0 0.0
        %694 = vmatpush1.msra.mxu0 0.0
        %695 = vmatprep.subr.mxu0 0.0
        %696 = vmatpush1.msra.mxu0 0.0
        %697 = vmatprep.subr.mxu0 0.0
        %698 = vmatpush1.msra.mxu0 0.0
        %699 = vmatprep.subr.mxu0 0.0
        %700 = vmatpush1.msra.mxu0 0.0
        %701 = vmatprep.subr.mxu0 0.0
        %702 = vmatpush1.msra.mxu0 0.0
        %703 = vmatprep.subr.mxu0 0.0
        %704 = vmatpush1.msra.mxu0 0.0
        %705 = vmatprep.subr.mxu0 0.0
        %706 = vmatpush1.msra.mxu0 0.0
        %707 = vmatprep.subr.mxu0 0.0
        %708 = vmatpush1.msra.mxu0 0.0
        %709 = vmatprep.subr.mxu0 0.0
        %710 = vmatpush1.msra.mxu0 0.0
        %711 = vmatprep.subr.mxu0 0.0
        %712 = vmatpush1.msra.mxu0 0.0
        %713 = vmatprep.subr.mxu0 0.0
        %714 = vmatpush1.msra.mxu0 %v668
        %715 = vmatprep.subr.mxu0 0.0
        %716 = vmatpush2.msra.mxu0 0.0
        %717 = vmatprep.subr.mxu0 0.0
        %718 = vmatpush2.msra.mxu0 0.0
        %719 = vmatprep.subr.mxu0 0.0
        %720 = vmatpush2.msra.mxu0 0.0
        %721 = vmatprep.subr.mxu0 0.0
        %722 = vmatpush2.msra.mxu0 0.0
        %723 = vmatprep.subr.mxu0 0.0
        %724 = vmatpush2.msra.mxu0 0.0
        %725 = vmatprep.subr.mxu0 0.0
        %726 = vmatpush2.msra.mxu0 0.0
        %727 = vmatprep.subr.mxu0 0.0
        %728 = vmatpush2.msra.mxu0 0.0
        %729 = vmatprep.subr.mxu0 0.0
        %730 = vmatpush2.msra.mxu0 0.0
        %731 = vmatprep.subr.mxu0 0.0
        %732 = vmatpush2.msra.mxu0 0.0
        %733 = vmatprep.subr.mxu0 0.0
        %734 = vmatpush2.msra.mxu0 0.0
        %735 = vmatprep.subr.mxu0 0.0
        %736 = vmatpush2.msra.mxu0 0.0
        %737 = vmatprep.subr.mxu0 0.0
        %738 = vmatpush2.msra.mxu0 0.0
        %739 = vmatprep.subr.mxu0 0.0
        %740 = vmatpush2.msra.mxu0 0.0
        %741 = vmatprep.subr.mxu0 0.0
        %742 = vmatpush2.msra.mxu0 0.0
        %743 = vmatprep.subr.mxu0 0.0
        %744 = vmatpush2.msra.mxu0 0.0
        %745 = vmatprep.subr.mxu0 0.0
        %746 = vmatpush2.msra.mxu0 0.0
        %747 = vmatprep.mubr.f32.mxu0 0.0
        %748 = vmatmul.mubr.f32.gmra.mxu0 %v681
        %v749 = vpop.f32.mrf.mxu0
        %v750 = vadd.f32 %v677, %v749
        %v751 = vpop.f32.mrf.mxu0
        %752 = vdwg.mxu0
        %vm753 = vcmask 130048
        %v754 = vsel %vm753, %v750, -inf
        %755 = vmax.xlane.f32.xlu0 %v754
        %v756 = vpop.xlane.xlu0 %755
        %v757 = vsub.f32 %v750, %v756
        %v758 = vmul.f32 %v757, 1.442695
        %v759 = vpow.pop %v758
        %v760 = vsel %vm753, %v759, 0.0
        %761 = vadd.xlane.f32.xlu0 %v760
        %v762 = vpop.xlane.xlu0 %761
        %v763 = vrcp.pop %v762
        %v764 = vmul.f32 %v759, %v763
        %765 = vxpose.xlu0.b32.start [1/16] %v764, 128
        %766 = vxpose.xlu0.b32.cont [2/16] 0.0, 128
        %767 = vxpose.xlu0.b32.cont [3/16] 0.0, 128
        %768 = vxpose.xlu0.b32.cont [4/16] 0.0, 128
        %769 = vxpose.xlu0.b32.cont [5/16] 0.0, 128
        %770 = vxpose.xlu0.b32.cont [6/16] 0.0, 128
        %771 = vxpose.xlu0.b32.cont [7/16] 0.0, 128
        %772 = vxpose.xlu0.b32.cont [8/16] 0.0, 128
        %773 = vxpose.xlu0.b32.cont [9/16] 0.0, 128
        %774 = vxpose.xlu0.b32.cont [10/16] 0.0, 128
        %775 = vxpose.xlu0.b32.cont [11/16] 0.0, 128
        %776 = vxpose.xlu0.b32.cont [12/16] 0.0, 128
        %777 = vxpose.xlu0.b32.cont [13/16] 0.0, 128
        %778 = vxpose.xlu0.b32.cont [14/16] 0.0, 128
        %779 = vxpose.xlu0.b32.cont [15/16] 0.0, 128
        %780 = vxpose.xlu0.b32.end [16/16] 0.0, 128
        %v781 = vpop.trf.xlu0
        %v782 = vpop.trf.xlu0
        %v783 = vpop.trf.xlu0
        %v784 = vpop.trf.xlu0
        %v785 = vpop.trf.xlu0
        %v786 = vpop.trf.xlu0
        %v787 = vpop.trf.xlu0
        %v788 = vpop.trf.xlu0
        %v789 = vpop.trf.xlu0
        %v790 = vpop.trf.xlu0
        %v791 = vpop.trf.xlu0
        %v792 = vpop.trf.xlu0
        %v793 = vpop.trf.xlu0
        %v794 = vpop.trf.xlu0
        %v795 = vpop.trf.xlu0
        %v796 = vpop.trf.xlu0
        %797 = vrot.lane.b32.xlu0 %v665, 96
        %v798 = vpop.permute.xlu0 %797
        %v801 = vsel %vm679, %v781, 0
        %v804 = vsel %vm679, %v782, 0
        %806 = vmatprep.subr.mxu0 0.0
        %807 = vmatpush1.msra.mxu0 0.0
        %808 = vmatprep.subr.mxu0 0.0
        %809 = vmatpush1.msra.mxu0 0.0
        %810 = vmatprep.subr.mxu0 0.0
        %811 = vmatpush1.msra.mxu0 0.0
        %812 = vmatprep.subr.mxu0 0.0
        %813 = vmatpush1.msra.mxu0 0.0
        %814 = vmatprep.subr.mxu0 0.0
        %815 = vmatpush1.msra.mxu0 0.0
        %816 = vmatprep.subr.mxu0 0.0
        %817 = vmatpush1.msra.mxu0 0.0
        %818 = vmatprep.subr.mxu0 0.0
        %819 = vmatpush1.msra.mxu0 0.0
        %820 = vmatprep.subr.mxu0 0.0
        %821 = vmatpush1.msra.mxu0 0.0
        %822 = vmatprep.subr.mxu0 0.0
        %823 = vmatpush1.msra.mxu0 0.0
        %824 = vmatprep.subr.mxu0 0.0
        %825 = vmatpush1.msra.mxu0 0.0
        %826 = vmatprep.subr.mxu0 0.0
        %827 = vmatpush1.msra.mxu0 0.0
        %828 = vmatprep.subr.mxu0 0.0
        %829 = vmatpush1.msra.mxu0 0.0
        %830 = vmatprep.subr.mxu0 0.0
        %831 = vmatpush1.msra.mxu0 0.0
        %832 = vmatprep.subr.mxu0 0.0
        %833 = vmatpush1.msra.mxu0 0.0
        %834 = vmatprep.subr.mxu0 0.0
        %835 = vmatpush1.msra.mxu0 0.0
        %836 = vmatprep.subr.mxu0 0.0
        %837 = vmatpush1.msra.mxu0 %v798
        %838 = vmatprep.subr.mxu0 0.0
        %839 = vmatpush2.msra.mxu0 0.0
        %840 = vmatprep.subr.mxu0 0.0
        %841 = vmatpush2.msra.mxu0 0.0
        %842 = vmatprep.subr.mxu0 0.0
        %843 = vmatpush2.msra.mxu0 0.0
        %844 = vmatprep.subr.mxu0 0.0
        %845 = vmatpush2.msra.mxu0 0.0
        %846 = vmatprep.subr.mxu0 0.0
        %847 = vmatpush2.msra.mxu0 0.0
        %848 = vmatprep.subr.mxu0 0.0
        %849 = vmatpush2.msra.mxu0 0.0
        %850 = vmatprep.subr.mxu0 0.0
        %851 = vmatpush2.msra.mxu0 0.0
        %852 = vmatprep.subr.mxu0 0.0
        %853 = vmatpush2.msra.mxu0 0.0
        %854 = vmatprep.subr.mxu0 0.0
        %855 = vmatpush2.msra.mxu0 0.0
        %856 = vmatprep.subr.mxu0 0.0
        %857 = vmatpush2.msra.mxu0 0.0
        %858 = vmatprep.subr.mxu0 0.0
        %859 = vmatpush2.msra.mxu0 0.0
        %860 = vmatprep.subr.mxu0 0.0
        %861 = vmatpush2.msra.mxu0 0.0
        %862 = vmatprep.subr.mxu0 0.0
        %863 = vmatpush2.msra.mxu0 0.0
        %864 = vmatprep.subr.mxu0 0.0
        %865 = vmatpush2.msra.mxu0 0.0
        %866 = vmatprep.subr.mxu0 0.0
        %867 = vmatpush2.msra.mxu0 0.0
        %868 = vmatprep.subr.mxu0 0.0
        %869 = vmatpush2.msra.mxu0 0.0
        %870 = vmatprep.mubr.f32.mxu0 0.0
        %871 = vmatmul.mubr.f32.gmra.mxu0 %v801
        %v872 = vpop.f32.mrf.mxu0
        %v873 = vadd.f32 0.0, %v872
        %v874 = vpop.f32.mrf.mxu0
        %875 = vmatprep.mubr.f32.mxu0 0.0
        %876 = vmatmul.mubr.f32.gmra.mxu0 %v804
        %v877 = vpop.f32.mrf.mxu0
        %v878 = vadd.f32 0.0, %v877
        %v879 = vpop.f32.mrf.mxu0
        %880 = vdwg.mxu0
        %881 = vrot.lane.b32.xlu0 %v665, 120
        %v882 = vpop.permute.xlu0 %881
        %v883 = vsel %vm679, %v882, 0
        %885 = vmatprep.subr.mxu0 0.0
        %886 = vmatpush1.msra.mxu0 0.0
        %887 = vmatprep.subr.mxu0 0.0
        %888 = vmatpush1.msra.mxu0 0.0
        %889 = vmatprep.subr.mxu0 0.0
        %890 = vmatpush1.msra.mxu0 0.0
        %891 = vmatprep.subr.mxu0 0.0
        %892 = vmatpush1.msra.mxu0 0.0
        %893 = vmatprep.subr.mxu0 0.0
        %894 = vmatpush1.msra.mxu0 0.0
        %895 = vmatprep.subr.mxu0 0.0
        %896 = vmatpush1.msra.mxu0 0.0
        %897 = vmatprep.subr.mxu0 0.0
        %898 = vmatpush1.msra.mxu0 0.0
        %899 = vmatprep.subr.mxu0 0.0
        %900 = vmatpush1.msra.mxu0 0.0
        %901 = vmatprep.subr.mxu0 0.0
        %902 = vmatpush1.msra.mxu0 0.0
        %903 = vmatprep.subr.mxu0 0.0
        %904 = vmatpush1.msra.mxu0 0.0
        %905 = vmatprep.subr.mxu0 0.0
        %906 = vmatpush1.msra.mxu0 0.0
        %907 = vmatprep.subr.mxu0 0.0
        %908 = vmatpush1.msra.mxu0 0.0
        %909 = vmatprep.subr.mxu0 0.0
        %910 = vmatpush1.msra.mxu0 0.0
        %911 = vmatprep.subr.mxu0 0.0
        %912 = vmatpush1.msra.mxu0 0.0
        %913 = vmatprep.subr.mxu0 0.0
        %914 = vmatpush1.msra.mxu0 0.0
        %915 = vmatprep.subr.mxu0 0.0
        %916 = vmatpush1.msra.mxu0 %v669
        %917 = vmatprep.subr.mxu0 0.0
        %918 = vmatpush2.msra.mxu0 0.0
        %919 = vmatprep.subr.mxu0 0.0
        %920 = vmatpush2.msra.mxu0 0.0
        %921 = vmatprep.subr.mxu0 0.0
        %922 = vmatpush2.msra.mxu0 0.0
        %923 = vmatprep.subr.mxu0 0.0
        %924 = vmatpush2.msra.mxu0 0.0
        %925 = vmatprep.subr.mxu0 0.0
        %926 = vmatpush2.msra.mxu0 0.0
        %927 = vmatprep.subr.mxu0 0.0
        %928 = vmatpush2.msra.mxu0 0.0
        %929 = vmatprep.subr.mxu0 0.0
        %930 = vmatpush2.msra.mxu0 0.0
        %931 = vmatprep.subr.mxu0 0.0
        %932 = vmatpush2.msra.mxu0 0.0
        %933 = vmatprep.subr.mxu0 0.0
        %934 = vmatpush2.msra.mxu0 0.0
        %935 = vmatprep.subr.mxu0 0.0
        %936 = vmatpush2.msra.mxu0 0.0
        %937 = vmatprep.subr.mxu0 0.0
        %938 = vmatpush2.msra.mxu0 0.0
        %939 = vmatprep.subr.mxu0 0.0
        %940 = vmatpush2.msra.mxu0 0.0
        %941 = vmatprep.subr.mxu0 0.0
        %942 = vmatpush2.msra.mxu0 0.0
        %943 = vmatprep.subr.mxu0 0.0
        %944 = vmatpush2.msra.mxu0 0.0
        %945 = vmatprep.subr.mxu0 0.0
        %946 = vmatpush2.msra.mxu0 0.0
        %947 = vmatprep.subr.mxu0 0.0
        %948 = vmatpush2.msra.mxu0 0.0
        %949 = vmatprep.mubr.f32.mxu0 0.0
        %950 = vmatmul.mubr.f32.gmra.mxu0 %v883
        %v951 = vpop.f32.mrf.mxu0
        %v952 = vadd.f32 %v677, %v951
        %v953 = vpop.f32.mrf.mxu0
        %954 = vdwg.mxu0
        %v955 = vsel %vm753, %v952, -inf
        %956 = vmax.xlane.f32.xlu0 %v955
        %v957 = vpop.xlane.xlu0 %956
        %v958 = vsub.f32 %v952, %v957
        %v959 = vmul.f32 %v958, 1.442695
        %v960 = vpow.pop %v959
        %v961 = vsel %vm753, %v960, 0.0
        %962 = vadd.xlane.f32.xlu0 %v961
        %v963 = vpop.xlane.xlu0 %962
        %v964 = vrcp.pop %v963
        %v965 = vmul.f32 %v960, %v964
        %966 = vxpose.xlu0.b32.start [1/16] %v965, 128
        %967 = vxpose.xlu0.b32.cont [2/16] 0.0, 128
        %968 = vxpose.xlu0.b32.cont [3/16] 0.0, 128
        %969 = vxpose.xlu0.b32.cont [4/16] 0.0, 128
        %970 = vxpose.xlu0.b32.cont [5/16] 0.0, 128
        %971 = vxpose.xlu0.b32.cont [6/16] 0.0, 128
        %972 = vxpose.xlu0.b32.cont [7/16] 0.0, 128
        %973 = vxpose.xlu0.b32.cont [8/16] 0.0, 128
        %974 = vxpose.xlu0.b32.cont [9/16] 0.0, 128
        %975 = vxpose.xlu0.b32.cont [10/16] 0.0, 128
        %976 = vxpose.xlu0.b32.cont [11/16] 0.0, 128
        %977 = vxpose.xlu0.b32.cont [12/16] 0.0, 128
        %978 = vxpose.xlu0.b32.cont [13/16] 0.0, 128
        %979 = vxpose.xlu0.b32.cont [14/16] 0.0, 128
        %980 = vxpose.xlu0.b32.cont [15/16] 0.0, 128
        %981 = vxpose.xlu0.b32.end [16/16] 0.0, 128
        %v982 = vpop.trf.xlu0
        %v983 = vpop.trf.xlu0
        %v984 = vpop.trf.xlu0
        %v985 = vpop.trf.xlu0
        %v986 = vpop.trf.xlu0
        %v987 = vpop.trf.xlu0
        %v988 = vpop.trf.xlu0
        %v989 = vpop.trf.xlu0
        %v990 = vpop.trf.xlu0
        %v991 = vpop.trf.xlu0
        %v992 = vpop.trf.xlu0
        %v993 = vpop.trf.xlu0
        %v994 = vpop.trf.xlu0
        %v995 = vpop.trf.xlu0
        %v996 = vpop.trf.xlu0
        %v997 = vpop.trf.xlu0
        %998 = vrot.lane.b32.xlu0 %v665, 88
        %v999 = vpop.permute.xlu0 %998
        %v1002 = vsel %vm679, %v982, 0
        %v1005 = vsel %vm679, %v983, 0
        %1007 = vmatprep.subr.mxu0 0.0
        %1008 = vmatpush1.msra.mxu0 0.0
        %1009 = vmatprep.subr.mxu0 0.0
        %1010 = vmatpush1.msra.mxu0 0.0
        %1011 = vmatprep.subr.mxu0 0.0
        %1012 = vmatpush1.msra.mxu0 0.0
        %1013 = vmatprep.subr.mxu0 0.0
        %1014 = vmatpush1.msra.mxu0 0.0
        %1015 = vmatprep.subr.mxu0 0.0
        %1016 = vmatpush1.msra.mxu0 0.0
        %1017 = vmatprep.subr.mxu0 0.0
        %1018 = vmatpush1.msra.mxu0 0.0
        %1019 = vmatprep.subr.mxu0 0.0
        %1020 = vmatpush1.msra.mxu0 0.0
        %1021 = vmatprep.subr.mxu0 0.0
        %1022 = vmatpush1.msra.mxu0 0.0
        %1023 = vmatprep.subr.mxu0 0.0
        %1024 = vmatpush1.msra.mxu0 0.0
        %1025 = vmatprep.subr.mxu0 0.0
        %1026 = vmatpush1.msra.mxu0 0.0
        %1027 = vmatprep.subr.mxu0 0.0
        %1028 = vmatpush1.msra.mxu0 0.0
        %1029 = vmatprep.subr.mxu0 0.0
        %1030 = vmatpush1.msra.mxu0 0.0
        %1031 = vmatprep.subr.mxu0 0.0
        %1032 = vmatpush1.msra.mxu0 0.0
        %1033 = vmatprep.subr.mxu0 0.0
        %1034 = vmatpush1.msra.mxu0 0.0
        %1035 = vmatprep.subr.mxu0 0.0
        %1036 = vmatpush1.msra.mxu0 0.0
        %1037 = vmatprep.subr.mxu0 0.0
        %1038 = vmatpush1.msra.mxu0 %v999
        %1039 = vmatprep.subr.mxu0 0.0
        %1040 = vmatpush2.msra.mxu0 0.0
        %1041 = vmatprep.subr.mxu0 0.0
        %1042 = vmatpush2.msra.mxu0 0.0
        %1043 = vmatprep.subr.mxu0 0.0
        %1044 = vmatpush2.msra.mxu0 0.0
        %1045 = vmatprep.subr.mxu0 0.0
        %1046 = vmatpush2.msra.mxu0 0.0
        %1047 = vmatprep.subr.mxu0 0.0
        %1048 = vmatpush2.msra.mxu0 0.0
        %1049 = vmatprep.subr.mxu0 0.0
        %1050 = vmatpush2.msra.mxu0 0.0
        %1051 = vmatprep.subr.mxu0 0.0
        %1052 = vmatpush2.msra.mxu0 0.0
        %1053 = vmatprep.subr.mxu0 0.0
        %1054 = vmatpush2.msra.mxu0 0.0
        %1055 = vmatprep.subr.mxu0 0.0
        %1056 = vmatpush2.msra.mxu0 0.0
        %1057 = vmatprep.subr.mxu0 0.0
        %1058 = vmatpush2.msra.mxu0 0.0
        %1059 = vmatprep.subr.mxu0 0.0
        %1060 = vmatpush2.msra.mxu0 0.0
        %1061 = vmatprep.subr.mxu0 0.0
        %1062 = vmatpush2.msra.mxu0 0.0
        %1063 = vmatprep.subr.mxu0 0.0
        %1064 = vmatpush2.msra.mxu0 0.0
        %1065 = vmatprep.subr.mxu0 0.0
        %1066 = vmatpush2.msra.mxu0 0.0
        %1067 = vmatprep.subr.mxu0 0.0
        %1068 = vmatpush2.msra.mxu0 0.0
        %1069 = vmatprep.subr.mxu0 0.0
        %1070 = vmatpush2.msra.mxu0 0.0
        %1071 = vmatprep.mubr.f32.mxu0 0.0
        %1072 = vmatmul.mubr.f32.gmra.mxu0 %v1002
        %v1073 = vpop.f32.mrf.mxu0
        %v1074 = vadd.f32 0.0, %v1073
        %v1075 = vpop.f32.mrf.mxu0
        %1076 = vmatprep.mubr.f32.mxu0 0.0
        %1077 = vmatmul.mubr.f32.gmra.mxu0 %v1005
        %v1078 = vpop.f32.mrf.mxu0
        %v1079 = vadd.f32 0.0, %v1078
        %v1080 = vpop.f32.mrf.mxu0
        %1081 = vdwg.mxu0
        %1082 = vrot.lane.b32.xlu0 %v665, 112
        %v1083 = vpop.permute.xlu0 %1082
        %v1084 = vsel %vm679, %v1083, 0
        %1086 = vmatprep.subr.mxu0 0.0
        %1087 = vmatpush1.msra.mxu0 0.0
        %1088 = vmatprep.subr.mxu0 0.0
        %1089 = vmatpush1.msra.mxu0 0.0
        %1090 = vmatprep.subr.mxu0 0.0
        %1091 = vmatpush1.msra.mxu0 0.0
        %1092 = vmatprep.subr.mxu0 0.0
        %1093 = vmatpush1.msra.mxu0 0.0
        %1094 = vmatprep.subr.mxu0 0.0
        %1095 = vmatpush1.msra.mxu0 0.0
        %1096 = vmatprep.subr.mxu0 0.0
        %1097 = vmatpush1.msra.mxu0 0.0
        %1098 = vmatprep.subr.mxu0 0.0
        %1099 = vmatpush1.msra.mxu0 0.0
        %1100 = vmatprep.subr.mxu0 0.0
        %1101 = vmatpush1.msra.mxu0 0.0
        %1102 = vmatprep.subr.mxu0 0.0
        %1103 = vmatpush1.msra.mxu0 0.0
        %1104 = vmatprep.subr.mxu0 0.0
        %1105 = vmatpush1.msra.mxu0 0.0
        %1106 = vmatprep.subr.mxu0 0.0
        %1107 = vmatpush1.msra.mxu0 0.0
        %1108 = vmatprep.subr.mxu0 0.0
        %1109 = vmatpush1.msra.mxu0 0.0
        %1110 = vmatprep.subr.mxu0 0.0
        %1111 = vmatpush1.msra.mxu0 0.0
        %1112 = vmatprep.subr.mxu0 0.0
        %1113 = vmatpush1.msra.mxu0 0.0
        %1114 = vmatprep.subr.mxu0 0.0
        %1115 = vmatpush1.msra.mxu0 0.0
        %1116 = vmatprep.subr.mxu0 0.0
        %1117 = vmatpush1.msra.mxu0 %v670
        %1118 = vmatprep.subr.mxu0 0.0
        %1119 = vmatpush2.msra.mxu0 0.0
        %1120 = vmatprep.subr.mxu0 0.0
        %1121 = vmatpush2.msra.mxu0 0.0
        %1122 = vmatprep.subr.mxu0 0.0
        %1123 = vmatpush2.msra.mxu0 0.0
        %1124 = vmatprep.subr.mxu0 0.0
        %1125 = vmatpush2.msra.mxu0 0.0
        %1126 = vmatprep.subr.mxu0 0.0
        %1127 = vmatpush2.msra.mxu0 0.0
        %1128 = vmatprep.subr.mxu0 0.0
        %1129 = vmatpush2.msra.mxu0 0.0
        %1130 = vmatprep.subr.mxu0 0.0
        %1131 = vmatpush2.msra.mxu0 0.0
        %1132 = vmatprep.subr.mxu0 0.0
        %1133 = vmatpush2.msra.mxu0 0.0
        %1134 = vmatprep.subr.mxu0 0.0
        %1135 = vmatpush2.msra.mxu0 0.0
        %1136 = vmatprep.subr.mxu0 0.0
        %1137 = vmatpush2.msra.mxu0 0.0
        %1138 = vmatprep.subr.mxu0 0.0
        %1139 = vmatpush2.msra.mxu0 0.0
        %1140 = vmatprep.subr.mxu0 0.0
        %1141 = vmatpush2.msra.mxu0 0.0
        %1142 = vmatprep.subr.mxu0 0.0
        %1143 = vmatpush2.msra.mxu0 0.0
        %1144 = vmatprep.subr.mxu0 0.0
        %1145 = vmatpush2.msra.mxu0 0.0
        %1146 = vmatprep.subr.mxu0 0.0
        %1147 = vmatpush2.msra.mxu0 0.0
        %1148 = vmatprep.subr.mxu0 0.0
        %1149 = vmatpush2.msra.mxu0 0.0
        %1150 = vmatprep.mubr.f32.mxu0 0.0
        %1151 = vmatmul.mubr.f32.gmra.mxu0 %v1084
        %v1152 = vpop.f32.mrf.mxu0
        %v1153 = vadd.f32 %v677, %v1152
        %v1154 = vpop.f32.mrf.mxu0
        %1155 = vdwg.mxu0
        %v1156 = vsel %vm753, %v1153, -inf
        %1157 = vmax.xlane.f32.xlu0 %v1156
        %v1158 = vpop.xlane.xlu0 %1157
        %v1159 = vsub.f32 %v1153, %v1158
        %v1160 = vmul.f32 %v1159, 1.442695
        %v1161 = vpow.pop %v1160
        %v1162 = vsel %vm753, %v1161, 0.0
        %1163 = vadd.xlane.f32.xlu0 %v1162
        %v1164 = vpop.xlane.xlu0 %1163
        %v1165 = vrcp.pop %v1164
        %v1166 = vmul.f32 %v1161, %v1165
        %1167 = vxpose.xlu0.b32.start [1/16] %v1166, 128
        %1168 = vxpose.xlu0.b32.cont [2/16] 0.0, 128
        %1169 = vxpose.xlu0.b32.cont [3/16] 0.0, 128
        %1170 = vxpose.xlu0.b32.cont [4/16] 0.0, 128
        %1171 = vxpose.xlu0.b32.cont [5/16] 0.0, 128
        %1172 = vxpose.xlu0.b32.cont [6/16] 0.0, 128
        %1173 = vxpose.xlu0.b32.cont [7/16] 0.0, 128
        %1174 = vxpose.xlu0.b32.cont [8/16] 0.0, 128
        %1175 = vxpose.xlu0.b32.cont [9/16] 0.0, 128
        %1176 = vxpose.xlu0.b32.cont [10/16] 0.0, 128
        %1177 = vxpose.xlu0.b32.cont [11/16] 0.0, 128
        %1178 = vxpose.xlu0.b32.cont [12/16] 0.0, 128
        %1179 = vxpose.xlu0.b32.cont [13/16] 0.0, 128
        %1180 = vxpose.xlu0.b32.cont [14/16] 0.0, 128
        %1181 = vxpose.xlu0.b32.cont [15/16] 0.0, 128
        %1182 = vxpose.xlu0.b32.end [16/16] 0.0, 128
        %v1183 = vpop.trf.xlu0
        %v1184 = vpop.trf.xlu0
        %v1185 = vpop.trf.xlu0
        %v1186 = vpop.trf.xlu0
        %v1187 = vpop.trf.xlu0
        %v1188 = vpop.trf.xlu0
        %v1189 = vpop.trf.xlu0
        %v1190 = vpop.trf.xlu0
        %v1191 = vpop.trf.xlu0
        %v1192 = vpop.trf.xlu0
        %v1193 = vpop.trf.xlu0
        %v1194 = vpop.trf.xlu0
        %v1195 = vpop.trf.xlu0
        %v1196 = vpop.trf.xlu0
        %v1197 = vpop.trf.xlu0
        %v1198 = vpop.trf.xlu0
        %1199 = vrot.lane.b32.xlu0 %v665, 80
        %v1200 = vpop.permute.xlu0 %1199
        %v1203 = vsel %vm679, %v1183, 0
        %v1206 = vsel %vm679, %v1184, 0
        %1208 = vmatprep.subr.mxu0 0.0
        %1209 = vmatpush1.msra.mxu0 0.0
        %1210 = vmatprep.subr.mxu0 0.0
        %1211 = vmatpush1.msra.mxu0 0.0
        %1212 = vmatprep.subr.mxu0 0.0
        %1213 = vmatpush1.msra.mxu0 0.0
        %1214 = vmatprep.subr.mxu0 0.0
        %1215 = vmatpush1.msra.mxu0 0.0
        %1216 = vmatprep.subr.mxu0 0.0
        %1217 = vmatpush1.msra.mxu0 0.0
        %1218 = vmatprep.subr.mxu0 0.0
        %1219 = vmatpush1.msra.mxu0 0.0
        %1220 = vmatprep.subr.mxu0 0.0
        %1221 = vmatpush1.msra.mxu0 0.0
        %1222 = vmatprep.subr.mxu0 0.0
        %1223 = vmatpush1.msra.mxu0 0.0
        %1224 = vmatprep.subr.mxu0 0.0
        %1225 = vmatpush1.msra.mxu0 0.0
        %1226 = vmatprep.subr.mxu0 0.0
        %1227 = vmatpush1.msra.mxu0 0.0
        %1228 = vmatprep.subr.mxu0 0.0
        %1229 = vmatpush1.msra.mxu0 0.0
        %1230 = vmatprep.subr.mxu0 0.0
        %1231 = vmatpush1.msra.mxu0 0.0
        %1232 = vmatprep.subr.mxu0 0.0
        %1233 = vmatpush1.msra.mxu0 0.0
        %1234 = vmatprep.subr.mxu0 0.0
        %1235 = vmatpush1.msra.mxu0 0.0
        %1236 = vmatprep.subr.mxu0 0.0
        %1237 = vmatpush1.msra.mxu0 0.0
        %1238 = vmatprep.subr.mxu0 0.0
        %1239 = vmatpush1.msra.mxu0 %v1200
        %1240 = vmatprep.subr.mxu0 0.0
        %1241 = vmatpush2.msra.mxu0 0.0
        %1242 = vmatprep.subr.mxu0 0.0
        %1243 = vmatpush2.msra.mxu0 0.0
        %1244 = vmatprep.subr.mxu0 0.0
        %1245 = vmatpush2.msra.mxu0 0.0
        %1246 = vmatprep.subr.mxu0 0.0
        %1247 = vmatpush2.msra.mxu0 0.0
        %1248 = vmatprep.subr.mxu0 0.0
        %1249 = vmatpush2.msra.mxu0 0.0
        %1250 = vmatprep.subr.mxu0 0.0
        %1251 = vmatpush2.msra.mxu0 0.0
        %1252 = vmatprep.subr.mxu0 0.0
        %1253 = vmatpush2.msra.mxu0 0.0
        %1254 = vmatprep.subr.mxu0 0.0
        %1255 = vmatpush2.msra.mxu0 0.0
        %1256 = vmatprep.subr.mxu0 0.0
        %1257 = vmatpush2.msra.mxu0 0.0
        %1258 = vmatprep.subr.mxu0 0.0
        %1259 = vmatpush2.msra.mxu0 0.0
        %1260 = vmatprep.subr.mxu0 0.0
        %1261 = vmatpush2.msra.mxu0 0.0
        %1262 = vmatprep.subr.mxu0 0.0
        %1263 = vmatpush2.msra.mxu0 0.0
        %1264 = vmatprep.subr.mxu0 0.0
        %1265 = vmatpush2.msra.mxu0 0.0
        %1266 = vmatprep.subr.mxu0 0.0
        %1267 = vmatpush2.msra.mxu0 0.0
        %1268 = vmatprep.subr.mxu0 0.0
        %1269 = vmatpush2.msra.mxu0 0.0
        %1270 = vmatprep.subr.mxu0 0.0
        %1271 = vmatpush2.msra.mxu0 0.0
        %1272 = vmatprep.mubr.f32.mxu0 0.0
        %1273 = vmatmul.mubr.f32.gmra.mxu0 %v1203
        %v1274 = vpop.f32.mrf.mxu0
        %v1275 = vadd.f32 0.0, %v1274
        %v1276 = vpop.f32.mrf.mxu0
        %1277 = vmatprep.mubr.f32.mxu0 0.0
        %1278 = vmatmul.mubr.f32.gmra.mxu0 %v1206
        %v1279 = vpop.f32.mrf.mxu0
        %v1280 = vadd.f32 0.0, %v1279
        %v1281 = vpop.f32.mrf.mxu0
        %1282 = vdwg.mxu0
        %1283 = vrot.lane.b32.xlu0 %v665, 104
        %v1284 = vpop.permute.xlu0 %1283
        %v1285 = vsel %vm679, %v1284, 0
        %1287 = vmatprep.subr.mxu0 0.0
        %1288 = vmatpush1.msra.mxu0 0.0
        %1289 = vmatprep.subr.mxu0 0.0
        %1290 = vmatpush1.msra.mxu0 0.0
        %1291 = vmatprep.subr.mxu0 0.0
        %1292 = vmatpush1.msra.mxu0 0.0
        %1293 = vmatprep.subr.mxu0 0.0
        %1294 = vmatpush1.msra.mxu0 0.0
        %1295 = vmatprep.subr.mxu0 0.0
        %1296 = vmatpush1.msra.mxu0 0.0
        %1297 = vmatprep.subr.mxu0 0.0
        %1298 = vmatpush1.msra.mxu0 0.0
        %1299 = vmatprep.subr.mxu0 0.0
        %1300 = vmatpush1.msra.mxu0 0.0
        %1301 = vmatprep.subr.mxu0 0.0
        %1302 = vmatpush1.msra.mxu0 0.0
        %1303 = vmatprep.subr.mxu0 0.0
        %1304 = vmatpush1.msra.mxu0 0.0
        %1305 = vmatprep.subr.mxu0 0.0
        %1306 = vmatpush1.msra.mxu0 0.0
        %1307 = vmatprep.subr.mxu0 0.0
        %1308 = vmatpush1.msra.mxu0 0.0
        %1309 = vmatprep.subr.mxu0 0.0
        %1310 = vmatpush1.msra.mxu0 0.0
        %1311 = vmatprep.subr.mxu0 0.0
        %1312 = vmatpush1.msra.mxu0 0.0
        %1313 = vmatprep.subr.mxu0 0.0
        %1314 = vmatpush1.msra.mxu0 0.0
        %1315 = vmatprep.subr.mxu0 0.0
        %1316 = vmatpush1.msra.mxu0 0.0
        %1317 = vmatprep.subr.mxu0 0.0
        %1318 = vmatpush1.msra.mxu0 %v671
        %1319 = vmatprep.subr.mxu0 0.0
        %1320 = vmatpush2.msra.mxu0 0.0
        %1321 = vmatprep.subr.mxu0 0.0
        %1322 = vmatpush2.msra.mxu0 0.0
        %1323 = vmatprep.subr.mxu0 0.0
        %1324 = vmatpush2.msra.mxu0 0.0
        %1325 = vmatprep.subr.mxu0 0.0
        %1326 = vmatpush2.msra.mxu0 0.0
        %1327 = vmatprep.subr.mxu0 0.0
        %1328 = vmatpush2.msra.mxu0 0.0
        %1329 = vmatprep.subr.mxu0 0.0
        %1330 = vmatpush2.msra.mxu0 0.0
        %1331 = vmatprep.subr.mxu0 0.0
        %1332 = vmatpush2.msra.mxu0 0.0
        %1333 = vmatprep.subr.mxu0 0.0
        %1334 = vmatpush2.msra.mxu0 0.0
        %1335 = vmatprep.subr.mxu0 0.0
        %1336 = vmatpush2.msra.mxu0 0.0
        %1337 = vmatprep.subr.mxu0 0.0
        %1338 = vmatpush2.msra.mxu0 0.0
        %1339 = vmatprep.subr.mxu0 0.0
        %1340 = vmatpush2.msra.mxu0 0.0
        %1341 = vmatprep.subr.mxu0 0.0
        %1342 = vmatpush2.msra.mxu0 0.0
        %1343 = vmatprep.subr.mxu0 0.0
        %1344 = vmatpush2.msra.mxu0 0.0
        %1345 = vmatprep.subr.mxu0 0.0
        %1346 = vmatpush2.msra.mxu0 0.0
        %1347 = vmatprep.subr.mxu0 0.0
        %1348 = vmatpush2.msra.mxu0 0.0
        %1349 = vmatprep.subr.mxu0 0.0
        %1350 = vmatpush2.msra.mxu0 0.0
        %1351 = vmatprep.mubr.f32.mxu0 0.0
        %1352 = vmatmul.mubr.f32.gmra.mxu0 %v1285
        %v1353 = vpop.f32.mrf.mxu0
        %v1354 = vadd.f32 %v677, %v1353
        %v1355 = vpop.f32.mrf.mxu0
        %1356 = vdwg.mxu0
        %v1357 = vsel %vm753, %v1354, -inf
        %1358 = vmax.xlane.f32.xlu0 %v1357
        %v1359 = vpop.xlane.xlu0 %1358
        %v1360 = vsub.f32 %v1354, %v1359
        %v1361 = vmul.f32 %v1360, 1.442695
        %v1362 = vpow.pop %v1361
        %v1363 = vsel %vm753, %v1362, 0.0
        %1364 = vadd.xlane.f32.xlu0 %v1363
        %v1365 = vpop.xlane.xlu0 %1364
        %v1366 = vrcp.pop %v1365
        %v1367 = vmul.f32 %v1362, %v1366
        %1368 = vxpose.xlu0.b32.start [1/16] %v1367, 128
        %1369 = vxpose.xlu0.b32.cont [2/16] 0.0, 128
        %1370 = vxpose.xlu0.b32.cont [3/16] 0.0, 128
        %1371 = vxpose.xlu0.b32.cont [4/16] 0.0, 128
        %1372 = vxpose.xlu0.b32.cont [5/16] 0.0, 128
        %1373 = vxpose.xlu0.b32.cont [6/16] 0.0, 128
        %1374 = vxpose.xlu0.b32.cont [7/16] 0.0, 128
        %1375 = vxpose.xlu0.b32.cont [8/16] 0.0, 128
        %1376 = vxpose.xlu0.b32.cont [9/16] 0.0, 128
        %1377 = vxpose.xlu0.b32.cont [10/16] 0.0, 128
        %1378 = vxpose.xlu0.b32.cont [11/16] 0.0, 128
        %1379 = vxpose.xlu0.b32.cont [12/16] 0.0, 128
        %1380 = vxpose.xlu0.b32.cont [13/16] 0.0, 128
        %1381 = vxpose.xlu0.b32.cont [14/16] 0.0, 128
        %1382 = vxpose.xlu0.b32.cont [15/16] 0.0, 128
        %1383 = vxpose.xlu0.b32.end [16/16] 0.0, 128
        %v1384 = vpop.trf.xlu0
        %v1385 = vpop.trf.xlu0
        %v1386 = vpop.trf.xlu0
        %v1387 = vpop.trf.xlu0
        %v1388 = vpop.trf.xlu0
        %v1389 = vpop.trf.xlu0
        %v1390 = vpop.trf.xlu0
        %v1391 = vpop.trf.xlu0
        %v1392 = vpop.trf.xlu0
        %v1393 = vpop.trf.xlu0
        %v1394 = vpop.trf.xlu0
        %v1395 = vpop.trf.xlu0
        %v1396 = vpop.trf.xlu0
        %v1397 = vpop.trf.xlu0
        %v1398 = vpop.trf.xlu0
        %v1399 = vpop.trf.xlu0
        %1400 = vrot.lane.b32.xlu0 %v665, 72
        %v1401 = vpop.permute.xlu0 %1400
        %v1404 = vsel %vm679, %v1384, 0
        %v1407 = vsel %vm679, %v1385, 0
        %1409 = vmatprep.subr.mxu0 0.0
        %1410 = vmatpush1.msra.mxu0 0.0
        %1411 = vmatprep.subr.mxu0 0.0
        %1412 = vmatpush1.msra.mxu0 0.0
        %1413 = vmatprep.subr.mxu0 0.0
        %1414 = vmatpush1.msra.mxu0 0.0
        %1415 = vmatprep.subr.mxu0 0.0
        %1416 = vmatpush1.msra.mxu0 0.0
        %1417 = vmatprep.subr.mxu0 0.0
        %1418 = vmatpush1.msra.mxu0 0.0
        %1419 = vmatprep.subr.mxu0 0.0
        %1420 = vmatpush1.msra.mxu0 0.0
        %1421 = vmatprep.subr.mxu0 0.0
        %1422 = vmatpush1.msra.mxu0 0.0
        %1423 = vmatprep.subr.mxu0 0.0
        %1424 = vmatpush1.msra.mxu0 0.0
        %1425 = vmatprep.subr.mxu0 0.0
        %1426 = vmatpush1.msra.mxu0 0.0
        %1427 = vmatprep.subr.mxu0 0.0
        %1428 = vmatpush1.msra.mxu0 0.0
        %1429 = vmatprep.subr.mxu0 0.0
        %1430 = vmatpush1.msra.mxu0 0.0
        %1431 = vmatprep.subr.mxu0 0.0
        %1432 = vmatpush1.msra.mxu0 0.0
        %1433 = vmatprep.subr.mxu0 0.0
        %1434 = vmatpush1.msra.mxu0 0.0
        %1435 = vmatprep.subr.mxu0 0.0
        %1436 = vmatpush1.msra.mxu0 0.0
        %1437 = vmatprep.subr.mxu0 0.0
        %1438 = vmatpush1.msra.mxu0 0.0
        %1439 = vmatprep.subr.mxu0 0.0
        %1440 = vmatpush1.msra.mxu0 %v1401
        %1441 = vmatprep.subr.mxu0 0.0
        %1442 = vmatpush2.msra.mxu0 0.0
        %1443 = vmatprep.subr.mxu0 0.0
        %1444 = vmatpush2.msra.mxu0 0.0
        %1445 = vmatprep.subr.mxu0 0.0
        %1446 = vmatpush2.msra.mxu0 0.0
        %1447 = vmatprep.subr.mxu0 0.0
        %1448 = vmatpush2.msra.mxu0 0.0
        %1449 = vmatprep.subr.mxu0 0.0
        %1450 = vmatpush2.msra.mxu0 0.0
        %1451 = vmatprep.subr.mxu0 0.0
        %1452 = vmatpush2.msra.mxu0 0.0
        %1453 = vmatprep.subr.mxu0 0.0
        %1454 = vmatpush2.msra.mxu0 0.0
        %1455 = vmatprep.subr.mxu0 0.0
        %1456 = vmatpush2.msra.mxu0 0.0
        %1457 = vmatprep.subr.mxu0 0.0
        %1458 = vmatpush2.msra.mxu0 0.0
        %1459 = vmatprep.subr.mxu0 0.0
        %1460 = vmatpush2.msra.mxu0 0.0
        %1461 = vmatprep.subr.mxu0 0.0
        %1462 = vmatpush2.msra.mxu0 0.0
        %1463 = vmatprep.subr.mxu0 0.0
        %1464 = vmatpush2.msra.mxu0 0.0
        %1465 = vmatprep.subr.mxu0 0.0
        %1466 = vmatpush2.msra.mxu0 0.0
        %1467 = vmatprep.subr.mxu0 0.0
        %1468 = vmatpush2.msra.mxu0 0.0
        %1469 = vmatprep.subr.mxu0 0.0
        %1470 = vmatpush2.msra.mxu0 0.0
        %1471 = vmatprep.subr.mxu0 0.0
        %1472 = vmatpush2.msra.mxu0 0.0
        %1473 = vmatprep.mubr.f32.mxu0 0.0
        %1474 = vmatmul.mubr.f32.gmra.mxu0 %v1404
        %v1475 = vpop.f32.mrf.mxu0
        %v1476 = vadd.f32 0.0, %v1475
        %v1477 = vpop.f32.mrf.mxu0
        %1478 = vmatprep.mubr.f32.mxu0 0.0
        %1479 = vmatmul.mubr.f32.gmra.mxu0 %v1407
        %v1480 = vpop.f32.mrf.mxu0
        %v1481 = vadd.f32 0.0, %v1480
        %v1482 = vpop.f32.mrf.mxu0
        %1483 = vdwg.mxu0
        %v1484 = vld [vmem:[#allocation4] sm:$0xff]
        %v1485 = vld [vmem:[#allocation4 + $0x8] sm:$0xff]
        %1488 = vrot.lane.b32.xlu0 %v1074, 8
        %v1489 = vpop.permute.xlu0 %1488
        %1490 = vrot.lane.b32.xlu0 %v1079, 8
        %v1491 = vpop.permute.xlu0 %1490
        %1496 = vrot.lane.b32.xlu0 %v1275, 16
        %v1497 = vpop.permute.xlu0 %1496
        %1498 = vrot.lane.b32.xlu0 %v1280, 16
        %v1499 = vpop.permute.xlu0 %1498
        %1504 = vrot.lane.b32.xlu0 %v1476, 24
        %v1505 = vpop.permute.xlu0 %1504
        %1506 = vrot.lane.b32.xlu0 %v1481, 24
        %v1507 = vpop.permute.xlu0 %1506
        %v1510 = vsel %vm679, %v873, %v1489
        %v1511 = vsel %vm679, %v878, %v1491
        %v1512 = vsel %vm753, %v1510, %v1497
        %v1513 = vsel %vm753, %v1511, %v1499
        %vm1514 = vcmask 195584
        %v1515 = vsel %vm1514, %v1512, %v1505
        %v1516 = vsel %vm1514, %v1513, %v1507
        %v1517 = vadd.f32 %v1484, %v1515
        %v1518 = vadd.f32 %v1485, %v1516
        %1519 = vst.msk [vmem:[#allocation4] sm:$0xff] %vm594, %v1517
        %1520 = vst.msk [vmem:[#allocation4 + $0x8] sm:$0xff] %vm594, %v1518
        %p1521 = scmp.eq.s32.totalorder %s34, 1
        // Predicated region
        $region77: #{tpu_custom_call.1} parent=51 // pred_check
          %p1522 = pneg %p1521
        $region78: #{tpu_custom_call.1} parent=51 // pred_check_branch
          %1524 = sbr.rel (%p1522) target = $region80
        $region79: #{tpu_custom_call.1} parent=51 // pred_region
          %v1525 = vld [vmem:[#allocation4] sm:$0xff]
          %v1526 = vld [vmem:[#allocation4 + $0x8] sm:$0xff]
          %v1527 = vld [vmem:[#allocation13] sm:$0xff]
          %v1528 = vld [vmem:[#allocation13 + $0x8] sm:$0xff]
          %v1529 = vld [vmem:[#allocation13 + $0x10] sm:$0xff]
          %v1530 = vld [vmem:[#allocation13 + $0x18] sm:$0xff]
          %v1531 = vld [vmem:[%s7] sm:$0x1]
          %v1533 = vlaneseq
          %v1534 = vshrl.u32 %v1533, 7
          %v1535 = vsub.s32 0, %v1534
          %v1536 = vrot.slane %v1531, %v1535
          %v1539 = vsel %vm594, %v1525, 0
          %v1542 = vsel %vm594, %v1526, 0
          %1544 = vmatprep.subr.mxu0 0.0
          %1545 = vmatpush1.msra.mxu0 0.0
          %1546 = vmatprep.subr.mxu0 0.0
          %1547 = vmatpush1.msra.mxu0 0.0
          %1548 = vmatprep.subr.mxu0 0.0
          %1549 = vmatpush1.msra.mxu0 0.0
          %1550 = vmatprep.subr.mxu0 0.0
          %1551 = vmatpush1.msra.mxu0 0.0
          %1552 = vmatprep.subr.mxu0 0.0
          %1553 = vmatpush1.msra.mxu0 0.0
          %1554 = vmatprep.subr.mxu0 0.0
          %1555 = vmatpush1.msra.mxu0 0.0
          %1556 = vmatprep.subr.mxu0 0.0
          %1557 = vmatpush1.msra.mxu0 0.0
          %1558 = vmatprep.subr.mxu0 0.0
          %1559 = vmatpush1.msra.mxu0 0.0
          %1560 = vmatprep.subr.mxu0 0.0
          %1561 = vmatpush1.msra.mxu0 0.0
          %1562 = vmatprep.subr.mxu0 0.0
          %1563 = vmatpush1.msra.mxu0 0.0
          %1564 = vmatprep.subr.mxu0 0.0
          %1565 = vmatpush1.msra.mxu0 0.0
          %1566 = vmatprep.subr.mxu0 0.0
          %1567 = vmatpush1.msra.mxu0 0.0
          %1568 = vmatprep.subr.mxu0 0.0
          %1569 = vmatpush1.msra.mxu0 %v1530
          %1570 = vmatprep.subr.mxu0 0.0
          %1571 = vmatpush1.msra.mxu0 %v1529
          %1572 = vmatprep.subr.mxu0 0.0
          %1573 = vmatpush1.msra.mxu0 %v1528
          %1574 = vmatprep.subr.mxu0 0.0
          %1575 = vmatpush1.msra.mxu0 %v1527
          %1576 = vmatprep.subr.mxu0 0.0
          %1577 = vmatpush2.msra.mxu0 0.0
          %1578 = vmatprep.subr.mxu0 0.0
          %1579 = vmatpush2.msra.mxu0 0.0
          %1580 = vmatprep.subr.mxu0 0.0
          %1581 = vmatpush2.msra.mxu0 0.0
          %1582 = vmatprep.subr.mxu0 0.0
          %1583 = vmatpush2.msra.mxu0 0.0
          %1584 = vmatprep.subr.mxu0 0.0
          %1585 = vmatpush2.msra.mxu0 0.0
          %1586 = vmatprep.subr.mxu0 0.0
          %1587 = vmatpush2.msra.mxu0 0.0
          %1588 = vmatprep.subr.mxu0 0.0
          %1589 = vmatpush2.msra.mxu0 0.0
          %1590 = vmatprep.subr.mxu0 0.0
          %1591 = vmatpush2.msra.mxu0 0.0
          %1592 = vmatprep.subr.mxu0 0.0
          %1593 = vmatpush2.msra.mxu0 0.0
          %1594 = vmatprep.subr.mxu0 0.0
          %1595 = vmatpush2.msra.mxu0 0.0
          %1596 = vmatprep.subr.mxu0 0.0
          %1597 = vmatpush2.msra.mxu0 0.0
          %1598 = vmatprep.subr.mxu0 0.0
          %1599 = vmatpush2.msra.mxu0 0.0
          %1600 = vmatprep.subr.mxu0 0.0
          %1601 = vmatpush2.msra.mxu0 0.0
          %1602 = vmatprep.subr.mxu0 0.0
          %1603 = vmatpush2.msra.mxu0 0.0
          %1604 = vmatprep.subr.mxu0 0.0
          %1605 = vmatpush2.msra.mxu0 0.0
          %1606 = vmatprep.subr.mxu0 0.0
          %1607 = vmatpush2.msra.mxu0 0.0
          %1608 = vmatprep.mubr.f32.mxu0 0.0
          %1609 = vmatmul.mubr.f32.gmra.mxu0 %v1539
          %v1610 = vpop.f32.mrf.mxu0
          %v1611 = vadd.f32 %v1536, %v1610
          %v1612 = vpop.f32.mrf.mxu0
          %1613 = vmatprep.mubr.f32.mxu0 0.0
          %1614 = vmatmul.mubr.f32.gmra.mxu0 %v1542
          %v1615 = vpop.f32.mrf.mxu0
          %v1616 = vadd.f32 %v1536, %v1615
          %v1617 = vpop.f32.mrf.mxu0
          %1618 = vdwg.mxu0
          %v1619 = vadd.f32 %v1611, %v413
          %v1620 = vadd.f32 %v1616, %v414
          %1621 = vst.msk [vmem:[%s412] sm:$0xff] %vm594, %v1619
          %1622 = vst.msk [vmem:[%s412 + $0x8] sm:$0xff] %vm594, %v1620
        $region80: #{tpu_custom_call.1} parent=51 // pred_fallthru
          _
        %s1623 = sand.u32 %s227, 1
        %s1624 = scalar_lea.sflag [#allocation7], %s1623
        %s1625 = sand.u32 %s227, 1
        %s1626 = smul.addr %s1625, 16
        %s1627 = scalar_lea.vmem [#allocation14], %s1626
        // Predicated region
        $region81: #{tpu_custom_call.1} parent=51 // pred_check
          %p1628 = pneg %p237
        $region82: #{tpu_custom_call.1} parent=51 // pred_check_branch
          %1630 = sbr.rel (%p1628) target = $region84
        $region83: #{tpu_custom_call.1} parent=51 // pred_region
          %s1632 = ssub.s32 256, 256
          %1633 = vsyncadd %s1624, %s1632
          %s1634 = smul.addr %s33, 2
          %s1635 = smul.addr %s1634, 128
          %s1636 = scalar_lea.hbm %s8, %s1635
          %s1637 = sshll.u32 %s1627, 4
          %s1638 = int_to_ptr.vmem [resolvable:$true] %s1637
          %1643 = dma.vmem_to_hbm [thread:$0]  %s1638, 256, %s1636, %s1624, 128, 128, 8
        $region84: #{tpu_custom_call.1} parent=51 // pred_fallthru
          _
      $region52: #{tpu_custom_call.1} parent=5 // pred_fallthru
        _
      %p1644 = scmp.le.s32.totalorder 2, %s24
      // Predicated region
      $region85: #{tpu_custom_call.1} parent=5 // pred_check
        %p1645 = pneg %p1644
      $region86: #{tpu_custom_call.1} parent=5 // pred_check_branch
        %1647 = sbr.rel (%p1645) target = $region88
      $region87: #{tpu_custom_call.1} parent=5 // pred_region
        %s1648 = ssub.s32 %s24, 2
        // Predicated region
        $region89: #{tpu_custom_call.1} parent=87 // pred_check
          %p1649 = pneg %p243
        $region90: #{tpu_custom_call.1} parent=87 // pred_check_branch
          %1651 = sbr.rel (%p1649) target = $region92
        $region91: #{tpu_custom_call.1} parent=87 // pred_region
          %s1652 = sand.u32 %s228, 1
          %s1653 = scalar_lea.sflag [#allocation7], %s1652
          %s1654 = sand.u32 %s228, 1
          %s1655 = smul.addr %s1654, 16
          %s1656 = scalar_lea.vmem [#allocation14], %s1655
          %1657 = dma.done %s1653, 256
        $region92: #{tpu_custom_call.1} parent=87 // pred_fallthru
          _
      $region88: #{tpu_custom_call.1} parent=5 // pred_fallthru
        _
    $region6: #{tpu_custom_call.1} parent=1 // loop_footer
      %s28 = sadd.s32 1, %s24
    $region7: #{tpu_custom_call.1} parent=1 // loop_footer_branch
      %23 = sbr.rel target = $region3
    $region8: #{tpu_custom_call.1} parent=1 // loop_exit
      _
    %1658 = vsyncpa [#allocation6], 1
    %s1659 = scalar_lea.sflag [#allocation6], 1
    %1660 = vsyncpa %s1659, 1
    %1661 = vsyncpa [#allocation9], 1
    %s1662 = scalar_lea.sflag [#allocation9], 1
    %1663 = vsyncpa %s1662, 1
    %1664 = vsyncpa [#allocation12], 1
    %1665 = vsyncpa [#allocation7], 1
    %s1666 = scalar_lea.sflag [#allocation7], 1
    %1667 = vsyncpa %s1666, 1

</llo_original>
